<compile_context>
chip_gen: v7x
topology: tpu7x:2x2x1
jax: 0.10.0
libtpu: 0.0.40
codegen_flags: <defaults>
</compile_context>

<pallas_src>
import functools

import jax
import jax.numpy as jnp
from jax.experimental import pallas as pl
from jax.experimental.pallas import tpu as pltpu


def _round_up(x, m):
    return (x + m - 1) // m * m


def _vmem_limit_bytes():
    """Per-kernel scoped VMEM budget, generation aware (v5e/v6e 128 MiB, v7x 64 MiB)."""
    try:
        cap = int(pltpu.get_tpu_info().vmem_capacity_bytes)
    except Exception:
        cap = 64 << 20                       # conservative fallback (v7x per-core size)
    return min(cap * 3 // 4, 96 << 20)


def _pick_tile_hw(hw, b, c, block_budget_bytes):
    """Spatial (lane-axis) tile: a multiple of 128 when possible, else the full extent."""
    per_col = 4 * b * c
    cols = max(128, (block_budget_bytes // per_col) // 128 * 128)
    if hw % 128 == 0:
        return min(hw, cols)
    if hw < 128:
        return hw                            # full (unaligned) extent: legal full-dim block
    return min(hw // 128 * 128, cols)        # trailing partial tile is masked in-kernel


def _se_fused_kernel(x_ref, w1_ref, w2_ref, o_ref, acc_ref, gate_ref, *scratch,
                     hw, inv_hw, tile_hw, batch, ragged, stage):
    """Fused SE block over grid (pass, spatial_tile).

    pass 0: accumulate the global average pool over spatial tiles; on the last tile run
            the bottleneck MLP and park the per-channel gate in VMEM scratch.
    pass 1: out = x * gate, broadcast along the spatial (lane) axis.

    x_ref    : (B, C, tile_hw) block of the (B, C, HW) activation (NCHW viewed flat)
    w1_ref   : (C, mid) full block        w2_ref : (mid, C) full block
    o_ref    : (B, C, tile_hw) output block
    acc_ref  : (round_up(B,8), C) f32 pool accumulator (extra rows stay zero)
    gate_ref : (B, C, 1) f32 gate
    scratch[0] (optional): (B, C, n_tiles*tile_hw) VMEM staging copy of x so pass 1
            never re-reads HBM.
    """
    p = pl.program_id(0)
    t = pl.program_id(1)
    n_t = pl.num_programs(1)
    stage_ref = scratch[0] if stage else None

    @pl.when(jnp.logical_and(p == 0, t == 0))
    def _():
        acc_ref[...] = jnp.zeros_like(acc_ref)

    @pl.when(p == 0)
    def _():
        x = x_ref[...]                                        # (B, C, tile_hw)
        if ragged:
            col = jax.lax.broadcasted_iota(jnp.int32, x.shape, 2) + t * tile_hw
            x = jnp.where(col < hw, x, jnp.zeros_like(x))     # mask OOB tail columns
        psum = jnp.sum(x, axis=-1)                            # (B, C) partial spatial sum
        acc_ref[pl.ds(0, batch), :] = acc_ref[pl.ds(0, batch), :] + psum
        if stage:
            off = pl.multiple_of(t * tile_hw, tile_hw)
            stage_ref[:, :, pl.ds(off, tile_hw)] = x

    @pl.when(jnp.logical_and(p == 0, t == n_t - 1))
    def _():
        avg = acc_ref[...] * inv_hw                           # (Bp, C), padded rows = 0
        h = jnp.maximum(
            jnp.dot(avg, w1_ref[...], preferred_element_type=jnp.float32,
                    precision=jax.lax.Precision.HIGHEST), 0.0)
        g = jax.nn.sigmoid(
            jnp.dot(h, w2_ref[...], preferred_element_type=jnp.float32,
                    precision=jax.lax.Precision.HIGHEST))
        gate_ref[...] = g[:batch, :, None]                    # (B, C, 1), stays in VMEM

    @pl.when(p == 1)
    def _():
        gate = gate_ref[...]                                  # (B, C, 1), lane broadcast
        if stage:
            off = pl.multiple_of(t * tile_hw, tile_hw)
            vals = stage_ref[:, :, pl.ds(off, tile_hw)]
        else:
            vals = x_ref[...]
        o_ref[...] = (vals * gate).astype(o_ref.dtype)


def se_attention_forward(x_nchw, w1, w2, *, max_block_bytes=None):
    """SEAttention forward.

    x_nchw: (B, C, H, W) float32 (PyTorch layout).
    w1:     (C, mid)  == torch fc[0].weight.T  (bias=False)
    w2:     (mid, C)  == torch fc[2].weight.T  (bias=False)
    Returns (B, C, H, W).
    """
    B, C, H, W = x_nchw.shape
    mid = w1.shape[1]
    assert w1.shape == (C, mid) and w2.shape == (mid, C)
    HW = H * W
    Bp = _round_up(B, 8)

    x3 = x_nchw.reshape(B, C, HW)        # free view of NCHW; no HBM transpose/pad

    vmem_limit = _vmem_limit_bytes()
    weight_bytes = 2 * 4 * (C * mid + mid * C)                    # double-buffered weights
    acc_bytes = 4 * Bp * _round_up(C, 128)
    gate_bytes = 4 * B * _round_up(C, 8) * 128
    slack = 2 << 20
    avail = max(vmem_limit - weight_bytes - acc_bytes - gate_bytes - slack, 1 << 20)
    block_budget = avail // 5                                     # 2 in + 2 out buffers + margin
    if max_block_bytes is not None:
        block_budget = min(block_budget, max_block_bytes)

    tile_hw = _pick_tile_hw(HW, B, C, block_budget)
    n_tiles = (HW + tile_hw - 1) // tile_hw
    ragged = (HW % tile_hw) != 0
    block_bytes = 4 * B * C * tile_hw
    stage_bytes = 4 * B * C * n_tiles * tile_hw
    stage = (n_tiles > 1) and (4 * block_bytes + stage_bytes + weight_bytes
                               + acc_bytes + gate_bytes + slack <= vmem_limit)

    if stage:
        # Pass 1 pins x to the last fetched block (no re-fetch); data comes from staging.
        x_map = lambda p, t: (0, 0, t * (1 - p) + (n_tiles - 1) * p)
    else:
        x_map = lambda p, t: (0, 0, t)

    scratch = [
        pltpu.VMEM((Bp, C), jnp.float32),          # pool accumulator
        pltpu.VMEM((B, C, 1), jnp.float32),        # per-channel gate
    ]
    if stage:
        scratch.append(pltpu.VMEM((B, C, n_tiles * tile_hw), x_nchw.dtype))

    out = pl.pallas_call(
        functools.partial(_se_fused_kernel, hw=HW, inv_hw=1.0 / float(HW),
                          tile_hw=tile_hw, batch=B, ragged=ragged, stage=stage),
        out_shape=jax.ShapeDtypeStruct((B, C, HW), x_nchw.dtype),
        grid_spec=pltpu.PrefetchScalarGridSpec(
            num_scalar_prefetch=0,
            grid=(2, n_tiles),                                   # (pass, spatial tile)
            in_specs=[
                pl.BlockSpec((B, C, tile_hw), x_map),
                pl.BlockSpec((C, mid), lambda p, t: (0, 0)),
                pl.BlockSpec((mid, C), lambda p, t: (0, 0)),
            ],
            # Output stays resident (block 0) through pass 0 and is only materialized by
            # pass-1 writes, so no garbage ever lands in HBM and each tile is written once.
            out_specs=pl.BlockSpec((B, C, tile_hw), lambda p, t: (0, 0, t * p)),
            scratch_shapes=scratch,
        ),
        compiler_params=pltpu.CompilerParams(
            dimension_semantics=("arbitrary", "arbitrary"),      # sequential 2-pass reduction
            vmem_limit_bytes=vmem_limit,
        ),
    )(x3, w1, w2)

    return out.reshape(B, C, H, W)


# ---------------------------------------------------------------------------
# Demo / self-check
# ---------------------------------------------------------------------------

if __name__ == "__main__":
    key = jax.random.PRNGKey(0)

    def init_params(k, c, reduction):
        # nn.Linear(C, mid, bias=False).weight is (mid, C); we store transposes so the
        # kernel computes y @ w (identical math). Kaiming-uniform-style bounds.
        # TODO(synk): loading real pretrained torch weights has no Pallas equivalent;
        #             params are initialized deterministically in-script.
        mid = max(c // reduction, 1)
        k1, k2 = jax.random.split(k)
        b1 = 1.0 / (c ** 0.5)
        b2 = 1.0 / (mid ** 0.5)
        w1 = jax.random.uniform(k1, (c, mid), jnp.float32, minval=-b1, maxval=b1)
        w2 = jax.random.uniform(k2, (mid, c), jnp.float32, minval=-b2, maxval=b2)
        return w1, w2

    def reference(x, w1, w2):
        y = jnp.mean(x, axis=(2, 3))
        y = jnp.maximum(jnp.dot(y, w1, precision=jax.lax.Precision.HIGHEST), 0.0)
        y = jax.nn.sigmoid(jnp.dot(y, w2, precision=jax.lax.Precision.HIGHEST))
        return x * y[:, :, None, None]

    # Case 1: lane-aligned spatial extent (single-tile fast path).
    B, C, H, W, red = 2, 128, 16, 16, 16
    kx, kw, key = jax.random.split(key, 3)
    x = jax.random.normal(kx, (B, C, H, W), jnp.float32)
    w1, w2 = init_params(kw, C, red)
    out = jax.jit(se_attention_forward)(x, w1, w2)
    jax.block_until_ready(out)
    ref = reference(x, w1, w2)
    assert out.shape == (B, C, H, W)
    assert bool(jnp.all(jnp.isfinite(out)))
    assert bool(jnp.allclose(out, ref, atol=1e-4, rtol=1e-4)), \
        float(jnp.max(jnp.abs(out - ref)))

    # Case 2: ragged spatial extent + multi-tile reduction + VMEM staging path
    # (block budget forced small so the 23x23 map splits into 5 tiles with a masked tail).
    B, C, H, W, red = 2, 128, 23, 23, 16
    kx, kw, key = jax.random.split(key, 3)
    x = jax.random.normal(kx, (B, C, H, W), jnp.float32)
    w1, w2 = init_params(kw, C, red)
    fwd_small = jax.jit(functools.partial(se_attention_forward,
                                          max_block_bytes=B * C * 128 * 4))
    out = fwd_small(x, w1, w2)
    jax.block_until_ready(out)
    ref = reference(x, w1, w2)
    assert out.shape == (B, C, H, W)
    assert bool(jnp.all(jnp.isfinite(out)))
    assert bool(jnp.allclose(out, ref, atol=1e-4, rtol=1e-4)), \
        float(jnp.max(jnp.abs(out - ref)))

    print("KERNEL_OK")
</pallas_src>

<mosaic_0001>
module attributes {stable_mosaic.version = 11 : i64} {
  func.func @_se_fused_kernel(%arg0: i32, %arg1: i32, %arg2: memref<2x128x256xf32, #tpu.memory_space<vmem>>, %arg3: memref<128x8xf32, #tpu.memory_space<vmem>>, %arg4: memref<8x128xf32, #tpu.memory_space<vmem>>, %arg5: memref<2x128x256xf32, #tpu.memory_space<vmem>>, %arg6: memref<8x128xf32, #tpu.memory_space<vmem>>, %arg7: memref<2x128x1xf32, #tpu.memory_space<vmem>>) attributes {dimension_semantics = [#tpu.dimension_semantics<arbitrary>, #tpu.dimension_semantics<arbitrary>], iteration_bounds = array<i64: 2, 1>, scalar_prefetch = 0 : i64, scratch_operands = 2 : i64, tpu.core_type = #tpu.core_type<tc>, window_params = [{transform_indices = @transform_0, window_bounds = array<i64: 2, 128, 256>}, {pipeline_mode = #tpu.pipeline_mode<synchronous>, transform_indices = @transform_1, window_bounds = array<i64: 128, 8>}, {pipeline_mode = #tpu.pipeline_mode<synchronous>, transform_indices = @transform_2, window_bounds = array<i64: 8, 128>}, {transform_indices = @transform_3, window_bounds = array<i64: 2, 128, 256>}]} {
    %c0_i32 = arith.constant 0 : i32
    %0 = arith.cmpi eq, %arg0, %c0_i32 : i32
    %c0_i32_0 = arith.constant 0 : i32
    %1 = arith.cmpi eq, %arg1, %c0_i32_0 : i32
    %2 = arith.andi %0, %1 : i1
    %3 = arith.extui %2 : i1 to i32
    %c0_i32_1 = arith.constant 0 : i32
    %4 = arith.cmpi ne, %3, %c0_i32_1 : i32
    scf.if %4 {
      %cst = arith.constant 0.000000e+00 : f32
      %16 = vector.broadcast %cst : f32 to vector<8x128xf32>
      %c0 = arith.constant 0 : index
      %c0_8 = arith.constant 0 : index
      %17 = vector.load %arg6[%c0, %c0_8] : memref<8x128xf32, #tpu.memory_space<vmem>>, vector<8x128xf32>
      tpu.vector_store %arg6[%c0, %c0_8], %16 {strides = array<i32>} : memref<8x128xf32, #tpu.memory_space<vmem>>, vector<8x128xf32>,
    } else {
    }
    %c0_i32_2 = arith.constant 0 : i32
    %5 = arith.cmpi eq, %arg0, %c0_i32_2 : i32
    %6 = arith.extui %5 : i1 to i32
    %c0_i32_3 = arith.constant 0 : i32
    %7 = arith.cmpi ne, %6, %c0_i32_3 : i32
    scf.if %7 {
      %c0 = arith.constant 0 : index
      %c0_8 = arith.constant 0 : index
      %c0_9 = arith.constant 0 : index
      %16 = vector.load %arg2[%c0, %c0_8, %c0_9] : memref<2x128x256xf32, #tpu.memory_space<vmem>>, vector<2x128x256xf32>
      %cst = arith.constant dense<0.000000e+00> : vector<2x128xf32>
      %17 = vector.multi_reduction <add>, %16, %cst [2] : vector<2x128x256xf32> to vector<2x128xf32>
      %c0_10 = arith.constant 0 : index
      %c0_11 = arith.constant 0 : index
      %18 = vector.load %arg6[%c0_10, %c0_11] : memref<8x128xf32, #tpu.memory_space<vmem>>, vector<2x128xf32>
      %19 = arith.addf %18, %17 : vector<2x128xf32>
      %c0_12 = arith.constant 0 : index
      %c0_13 = arith.constant 0 : index
      %20 = vector.load %arg6[%c0_12, %c0_13] : memref<8x128xf32, #tpu.memory_space<vmem>>, vector<2x128xf32>
      tpu.vector_store %arg6[%c0_12, %c0_13], %19 {strides = array<i32>} : memref<8x128xf32, #tpu.memory_space<vmem>>, vector<2x128xf32>,
    } else {
    }
    %c0_i32_4 = arith.constant 0 : i32
    %8 = arith.cmpi eq, %arg0, %c0_i32_4 : i32
    %c0_i32_5 = arith.constant 0 : i32
    %9 = arith.cmpi eq, %arg1, %c0_i32_5 : i32
    %10 = arith.andi %8, %9 : i1
    %11 = arith.extui %10 : i1 to i32
    %c0_i32_6 = arith.constant 0 : i32
    %12 = arith.cmpi ne, %11, %c0_i32_6 : i32
    scf.if %12 {
      %c0 = arith.constant 0 : index
      %c0_8 = arith.constant 0 : index
      %16 = vector.load %arg6[%c0, %c0_8] : memref<8x128xf32, #tpu.memory_space<vmem>>, vector<8x128xf32>
      %cst = arith.constant 3.906250e-03 : f32
      %17 = vector.broadcast %cst : f32 to vector<8x128xf32>
      %18 = arith.mulf %16, %17 : vector<8x128xf32>
      %c0_9 = arith.constant 0 : index
      %c0_10 = arith.constant 0 : index
      %19 = vector.load %arg3[%c0_9, %c0_10] : memref<128x8xf32, #tpu.memory_space<vmem>>, vector<128x8xf32>
      %cst_11 = arith.constant dense<0.000000e+00> : vector<8x8xf32>
      %20 = tpu.matmul %18, %19, %cst_11 {dimension_numbers = #tpu.dot_dimension_numbers<[1], [0], [0], [1], [0, 0, 1, 1], [], []>, precision = #tpu.contract_precision<fp32>} : vector<8x128xf32>, vector<128x8xf32>, vector<8x8xf32> -> vector<8x8xf32>
      %cst_12 = arith.constant 0.000000e+00 : f32
      %21 = vector.broadcast %cst_12 : f32 to vector<8x8xf32>
      %22 = arith.maximumf %20, %21 : vector<8x8xf32>
      %c0_13 = arith.constant 0 : index
      %c0_14 = arith.constant 0 : index
      %23 = vector.load %arg4[%c0_13, %c0_14] : memref<8x128xf32, #tpu.memory_space<vmem>>, vector<8x128xf32>
      %cst_15 = arith.constant dense<0.000000e+00> : vector<8x128xf32>
      %24 = tpu.matmul %22, %23, %cst_15 {dimension_numbers = #tpu.dot_dimension_numbers<[1], [0], [0], [1], [0, 0, 1, 1], [], []>, precision = #tpu.contract_precision<fp32>} : vector<8x8xf32>, vector<8x128xf32>, vector<8x128xf32> -> vector<8x128xf32>
      %25 = arith.negf %24 : vector<8x128xf32>
      %26 = math.exp %25 : vector<8x128xf32>
      %cst_16 = arith.constant 1.000000e+00 : f32
      %27 = vector.broadcast %cst_16 : f32 to vector<8x128xf32>
      %28 = arith.addf %27, %26 : vector<8x128xf32>
      %29 = arith.divf %27, %28 : vector<8x128xf32>
      %30 = vector.extract_strided_slice %29 {offsets = [0, 0], sizes = [2, 128], strides = [1, 1]} : vector<8x128xf32> to vector<2x128xf32>
      %31 = vector.shape_cast %30 : vector<2x128xf32> to vector<2x128x1xf32>
      %c0_17 = arith.constant 0 : index
      %c0_18 = arith.constant 0 : index
      %c0_19 = arith.constant 0 : index
      %32 = vector.load %arg7[%c0_17, %c0_18, %c0_19] : memref<2x128x1xf32, #tpu.memory_space<vmem>>, vector<2x128x1xf32>
      tpu.vector_store %arg7[%c0_17, %c0_18, %c0_19], %31 {strides = array<i32>} : memref<2x128x1xf32, #tpu.memory_space<vmem>>, vector<2x128x1xf32>,
    } else {
    }
    %c1_i32 = arith.constant 1 : i32
    %13 = arith.cmpi eq, %arg0, %c1_i32 : i32
    %14 = arith.extui %13 : i1 to i32
    %c0_i32_7 = arith.constant 0 : i32
    %15 = arith.cmpi ne, %14, %c0_i32_7 : i32
    scf.if %15 {
      %c0 = arith.constant 0 : index
      %c0_8 = arith.constant 0 : index
      %c0_9 = arith.constant 0 : index
      %16 = vector.load %arg7[%c0, %c0_8, %c0_9] : memref<2x128x1xf32, #tpu.memory_space<vmem>>, vector<2x128x1xf32>
      %c0_10 = arith.constant 0 : index
      %c0_11 = arith.constant 0 : index
      %c0_12 = arith.constant 0 : index
      %17 = vector.load %arg2[%c0_10, %c0_11, %c0_12] : memref<2x128x256xf32, #tpu.memory_space<vmem>>, vector<2x128x256xf32>
      %18 = vector.broadcast %16 : vector<2x128x1xf32> to vector<2x128x256xf32>
      %19 = arith.mulf %17, %18 : vector<2x128x256xf32>
      %c0_13 = arith.constant 0 : index
      %c0_14 = arith.constant 0 : index
      %c0_15 = arith.constant 0 : index
      %20 = vector.load %arg5[%c0_13, %c0_14, %c0_15] : memref<2x128x256xf32, #tpu.memory_space<vmem>>, vector<2x128x256xf32>
      tpu.vector_store %arg5[%c0_13, %c0_14, %c0_15], %19 {strides = array<i32>} : memref<2x128x256xf32, #tpu.memory_space<vmem>>, vector<2x128x256xf32>,
    } else {
    }
    return
  }
  func.func @transform_0(%arg0: i32, %arg1: i32) -> (i32, i32, i32) {
    %c0_i32 = arith.constant 0 : i32
    %c0_i32_0 = arith.constant 0 : i32
    %c0_i32_1 = arith.constant 0 : i32
    return %c0_i32, %c0_i32_0, %arg1 : i32, i32, i32
  }
  func.func @transform_1(%arg0: i32, %arg1: i32) -> (i32, i32) {
    %c0_i32 = arith.constant 0 : i32
    %c0_i32_0 = arith.constant 0 : i32
    %c0_i32_1 = arith.constant 0 : i32
    return %c0_i32, %c0_i32_0 : i32, i32
  }
  func.func @transform_2(%arg0: i32, %arg1: i32) -> (i32, i32) {
    %c0_i32 = arith.constant 0 : i32
    %c0_i32_0 = arith.constant 0 : i32
    %c0_i32_1 = arith.constant 0 : i32
    return %c0_i32, %c0_i32_0 : i32, i32
  }
  func.func @transform_3(%arg0: i32, %arg1: i32) -> (i32, i32, i32) {
    %0 = arith.muli %arg1, %arg0 : i32
    %c0_i32 = arith.constant 0 : i32
    %c0_i32_0 = arith.constant 0 : i32
    %c0_i32_1 = arith.constant 0 : i32
    return %c0_i32, %c0_i32_0, %0 : i32, i32, i32
  }
}

</mosaic_0001>

<llo_original>
// kernel: se_attention_forward.1
$region0: #{se_attention_forward.1}
  #allocation0 [shape = 'u32[]', space=smem, size = 0x4, offset = 0x4, fixed_abs, tag = 'smem constant byte address 0x4 - core index']
  #allocation1 [shape = 'u32[144,128]{1,0:T(1,128)}', space=vmem, size = 0x12000, scoped, tag = 'internal scratch']
  #allocation2 [shape = 'f32[8,128]{1,0:T(8,128)}', space=vmem, size = 0x1000, scoped, tag = 'scratch operand']
  #allocation3 [shape = 'f32[2,128,1]{2,1,0:T(8,128)}', space=vmem, size = 0x20000, scoped, tag = 'scratch operand']
  %s0 = inlined_call_operand.vmem [shape: f32[2,128,256], index: 0, kind: input, shape index: {}]
  %s1 = inlined_call_operand.vmem [shape: f32[128,8], index: 1, kind: input, shape index: {}]
  %s2 = inlined_call_operand.vmem [shape: f32[8,128], index: 2, kind: input, shape index: {}]
  %s3 = inlined_call_operand.vmem [shape: f32[2,128,256], index: 3, kind: output, shape index: {}]
  %s4 = sld [smem:[#allocation0]]
  $region61: #{se_attention_forward.1} parent=0
    _
  %s6 = ssub.s32 1, %s4
  %s7 = scalar_select 0, %s6, %s4
  loop: start=0, step=1, limit=4
  $region2: #{se_attention_forward.1} parent=0 // loop_pre_header
    _
  $region3: #{se_attention_forward.1} parent=0 // loop_header
    %s9 = sphi 0, %s13
    %p10 = scmp.ge.s32.totalorder %s9, 4
    %s16 = sphi 0, %s28
    %s17 = sphi 0, %s24
    %s18 = sphi 0, %s16
    %s19 = sphi 0, %s17
    %s20 = sphi 0, %s18
    %s21 = sphi 0, %s19
    %s31 = sphi 0, %s33
    %s34 = sphi 0, %s31
    %s35 = sphi 0, %s34
    %s51 = sphi 0, %s35
    %s55 = sphi 0, %s55
    %s57 = sphi 0, %s55
    %s58 = sphi 0, %s57
    %s72 = sphi 0, %s58
    %s76 = sphi 0, %s76
    %s78 = sphi 0, %s76
    %s79 = sphi 0, %s78
    %s93 = sphi 0, %s79
    %s101 = sphi 0, %s103
    %s104 = sphi 0, %s101
    %s105 = sphi 0, %s104
    %s121 = sphi 0, %s105
  $region4: #{se_attention_forward.1} parent=0 // loop_header_branch
    %12 = sbr.rel (%p10) target = $region8
  $region5: #{se_attention_forward.1} parent=0 // loop_body
    %s14 = ssub.s32 %s9, 1
    %s15 = ssub.s32 %s9, 2
    %s22 = sadd.s32 1, %s17
    %p23 = scmp.ge.s32.totalorder %s22, 1
    %s24 = scalar_select %p23, 0, %s22
    %s25 = sadd.s32 1, %s16
    %s26 = scalar_select %p23, %s25, %s16
    %p27 = scmp.ge.s32.totalorder %s26, 2
    %s28 = scalar_select %p27, 0, %s26
    %s29 = ssub.s32 %s17, %s24
    %p30 = scmp.eq.s32.totalorder %s29, 0
    %s32 = sadd.s32 %s31, 1
    %s33 = scalar_select %p30, %s31, %s32
    %p36 = pneg %p30
    %p37 = scmp.eq.s32.totalorder %s9, 1
    %p38 = por %p36, %p37
    %p39 = scmp.ne.s32.totalorder %s31, %s34
    %p40 = scmp.eq.s32.totalorder %s9, 0
    %p41 = por %p39, %p40
    %p42 = scmp.ne.s32.totalorder %s31, %s34
    %p43 = scmp.eq.s32.totalorder %s14, 1
    %p44 = por %p42, %p43
    %p45 = scmp.ne.s32.totalorder %s34, %s35
    %p46 = scmp.eq.s32.totalorder %s14, 0
    %p47 = por %p45, %p46
    %p48 = scmp.ne.s32.totalorder %s34, %s35
    %p49 = scmp.eq.s32.totalorder %s15, 1
    %p50 = por %p48, %p49
    %p52 = scmp.ne.s32.totalorder %s35, %s51
    %p53 = scmp.eq.s32.totalorder %s15, 0
    %p54 = por %p52, %p53
    %s56 = sadd.s32 %s55, 1
    %p59 = scmp.eq.s32.totalorder %s9, 1
    %p60 = scmp.ne.s32.totalorder %s55, %s57
    %p61 = scmp.eq.s32.totalorder %s9, 0
    %p62 = por %p60, %p61
    %p63 = scmp.ne.s32.totalorder %s55, %s57
    %p64 = scmp.eq.s32.totalorder %s14, 1
    %p65 = por %p63, %p64
    %p66 = scmp.ne.s32.totalorder %s57, %s58
    %p67 = scmp.eq.s32.totalorder %s14, 0
    %p68 = por %p66, %p67
    %p69 = scmp.ne.s32.totalorder %s57, %s58
    %p70 = scmp.eq.s32.totalorder %s15, 1
    %p71 = por %p69, %p70
    %p73 = scmp.ne.s32.totalorder %s58, %s72
    %p74 = scmp.eq.s32.totalorder %s15, 0
    %p75 = por %p73, %p74
    %s77 = sadd.s32 %s76, 1
    %p80 = scmp.eq.s32.totalorder %s9, 1
    %p81 = scmp.ne.s32.totalorder %s76, %s78
    %p82 = scmp.eq.s32.totalorder %s9, 0
    %p83 = por %p81, %p82
    %p84 = scmp.ne.s32.totalorder %s76, %s78
    %p85 = scmp.eq.s32.totalorder %s14, 1
    %p86 = por %p84, %p85
    %p87 = scmp.ne.s32.totalorder %s78, %s79
    %p88 = scmp.eq.s32.totalorder %s14, 0
    %p89 = por %p87, %p88
    %p90 = scmp.ne.s32.totalorder %s78, %s79
    %p91 = scmp.eq.s32.totalorder %s15, 1
    %p92 = por %p90, %p91
    %p94 = scmp.ne.s32.totalorder %s79, %s93
    %p95 = scmp.eq.s32.totalorder %s15, 0
    %p96 = por %p94, %p95
    %s97 = smul.u32 %s17, %s16
    %s98 = smul.u32 %s24, %s28
    %s99 = ssub.s32 %s97, %s98
    %p100 = scmp.eq.s32.totalorder %s99, 0
    %s102 = sadd.s32 %s101, 1
    %s103 = scalar_select %p100, %s101, %s102
    %p106 = pneg %p100
    %p107 = scmp.eq.s32.totalorder %s9, 1
    %p108 = por %p106, %p107
    %p109 = scmp.ne.s32.totalorder %s101, %s104
    %p110 = scmp.eq.s32.totalorder %s9, 0
    %p111 = por %p109, %p110
    %p112 = scmp.ne.s32.totalorder %s101, %s104
    %p113 = scmp.eq.s32.totalorder %s14, 1
    %p114 = por %p112, %p113
    %p115 = scmp.ne.s32.totalorder %s104, %s105
    %p116 = scmp.eq.s32.totalorder %s14, 0
    %p117 = por %p115, %p116
    %p118 = scmp.ne.s32.totalorder %s104, %s105
    %p119 = scmp.eq.s32.totalorder %s15, 1
    %p120 = por %p118, %p119
    %p122 = scmp.ne.s32.totalorder %s105, %s121
    %p123 = scmp.eq.s32.totalorder %s15, 0
    %p124 = por %p122, %p123
    %p125 = scmp.le.s32.totalorder 1, %s9
    %p126 = scmp.lt.s32.totalorder %s9, 3
    %p127 = pnand %p125, %p126
    %p128 = pneg %p127
    // Predicated region
    $region9: #{se_attention_forward.1} parent=5 // pred_check
      _
    $region10: #{se_attention_forward.1} parent=5 // pred_check_branch
      %130 = sbr.rel (%p127) target = $region12
    $region11: #{se_attention_forward.1} parent=5 // pred_region
      %s131 = ssub.s32 %s9, 1
      // Predicated region
      $region13: #{se_attention_forward.1} parent=11 // pred_check
        %p132 = pneg %p47
      $region14: #{se_attention_forward.1} parent=11 // pred_check_branch
        %134 = sbr.rel (%p132) target = $region16
      $region15: #{se_attention_forward.1} parent=11 // pred_region
        %s135 = smul.u32 2, %s19
        %p136 = scmp.lt.s32.totalorder %s135, 1
        %s137 = scalar_select %p136, %s135, 1
        %s138 = smul.addr %s137, 8
        %s139 = scalar_lea.vmem %s0, %s138
        %s140 = smul.u32 2, %s19
      $region16: #{se_attention_forward.1} parent=11 // pred_fallthru
        _
      // Predicated region
      $region17: #{se_attention_forward.1} parent=11 // pred_check
        %p141 = pneg %p68
      $region18: #{se_attention_forward.1} parent=11 // pred_check_branch
        %143 = sbr.rel (%p141) target = $region20
      $region19: #{se_attention_forward.1} parent=11 // pred_region
        _
      $region20: #{se_attention_forward.1} parent=11 // pred_fallthru
        _
      // Predicated region
      $region21: #{se_attention_forward.1} parent=11 // pred_check
        %p144 = pneg %p89
      $region22: #{se_attention_forward.1} parent=11 // pred_check_branch
        %146 = sbr.rel (%p144) target = $region24
      $region23: #{se_attention_forward.1} parent=11 // pred_region
        _
      $region24: #{se_attention_forward.1} parent=11 // pred_fallthru
        _
    $region12: #{se_attention_forward.1} parent=5 // pred_fallthru
      _
    %p147 = scmp.lt.s32.totalorder %s9, 2
    // Predicated region
    $region25: #{se_attention_forward.1} parent=5 // pred_check
      %p148 = pneg %p147
    $region26: #{se_attention_forward.1} parent=5 // pred_check_branch
      %150 = sbr.rel (%p148) target = $region28
    $region27: #{se_attention_forward.1} parent=5 // pred_region
      _
    $region28: #{se_attention_forward.1} parent=5 // pred_fallthru
      _
    %p151 = scmp.le.s32.totalorder 1, %s9
    %p152 = scmp.lt.s32.totalorder %s9, 3
    %p153 = pnand %p151, %p152
    %p154 = pneg %p153
    // Predicated region
    $region29: #{se_attention_forward.1} parent=5 // pred_check
      _
    $region30: #{se_attention_forward.1} parent=5 // pred_check_branch
      %156 = sbr.rel (%p153) target = $region32
    $region31: #{se_attention_forward.1} parent=5 // pred_region
      %s157 = ssub.s32 %s9, 1
      %s158 = smul.u32 2, %s19
      %p159 = scmp.lt.s32.totalorder %s158, 1
      %s160 = scalar_select %p159, %s158, 1
      %s161 = smul.addr %s160, 8
      %s162 = scalar_lea.vmem %s0, %s161
      %p163 = pneg %p47
      %p164 = pneg %p44
      %p165 = pneg %p68
      %p166 = pneg %p65
      %p167 = pneg %p89
      %p168 = pneg %p86
      %p169 = pneg %p117
      %p170 = pneg %p114
      %s171 = smul.u32 %s19, %s18
      %s172 = smul.u32 2, %s171
      %p173 = scmp.lt.s32.totalorder %s172, 1
      %s174 = scalar_select %p173, %s172, 1
      %s175 = smul.addr %s174, 8
      %s176 = scalar_lea.vmem %s3, %s175
      %s177 = smul.u32 2, %s19
      %p178 = scmp.lt.s32.totalorder %s177, 1
      %s179 = scalar_select %p178, %s177, 1
      %s180 = smul.addr %s179, 8
      %s181 = scalar_lea.vmem %s0, %s180
      %s182 = smul.u32 2, %s19
      %s183 = smul.u32 %s19, %s18
      %s184 = smul.u32 2, %s183
      %p185 = scmp.lt.s32.totalorder %s184, 1
      %s186 = scalar_select %p185, %s184, 1
      %s187 = smul.addr %s186, 8
      %s188 = scalar_lea.vmem %s3, %s187
      %s189 = smul.u32 %s19, %s18
      %s190 = smul.u32 2, %s189
      %p191 = scmp.eq.s32.totalorder %s18, 0
      %p192 = scmp.eq.s32.totalorder %s19, 0
      %p193 = pnand %p191, %p192
      %p194 = pneg %p193
      // Predicated region
      $region33: #{se_attention_forward.1} parent=31 // pred_check
        _
      $region34: #{se_attention_forward.1} parent=31 // pred_check_branch
        %196 = sbr.rel (%p193) target = $region36
      $region35: #{se_attention_forward.1} parent=31 // pred_region
        %197 = vst [vmem:[#allocation2] sm:$0xff] 0.0
      $region36: #{se_attention_forward.1} parent=31 // pred_fallthru
        _
      // Predicated region
      $region37: #{se_attention_forward.1} parent=31 // pred_check
        %p198 = pneg %p191
      $region38: #{se_attention_forward.1} parent=31 // pred_check_branch
        %200 = sbr.rel (%p198) target = $region40
      $region39: #{se_attention_forward.1} parent=31 // pred_region
        %v201 = vld [vmem:[%s181] sm:$0xff]
        %v202 = vld [vmem:[%s181 + $0x8] sm:$0xff]
        %v203 = vld [vmem:[%s181 + $0x10] sm:$0xff]
        %v204 = vld [vmem:[%s181 + $0x18] sm:$0xff]
        %v205 = vld [vmem:[%s181 + $0x20] sm:$0xff]
        %v206 = vld [vmem:[%s181 + $0x28] sm:$0xff]
        %v207 = vld [vmem:[%s181 + $0x30] sm:$0xff]
        %v208 = vld [vmem:[%s181 + $0x38] sm:$0xff]
        %v209 = vld [vmem:[%s181 + $0x40] sm:$0xff]
        %v210 = vld [vmem:[%s181 + $0x48] sm:$0xff]
        %v211 = vld [vmem:[%s181 + $0x50] sm:$0xff]
        %v212 = vld [vmem:[%s181 + $0x58] sm:$0xff]
        %v213 = vld [vmem:[%s181 + $0x60] sm:$0xff]
        %v214 = vld [vmem:[%s181 + $0x68] sm:$0xff]
        %v215 = vld [vmem:[%s181 + $0x70] sm:$0xff]
        %v216 = vld [vmem:[%s181 + $0x78] sm:$0xff]
        %v217 = vld [vmem:[%s181 + $0x80] sm:$0xff]
        %v218 = vld [vmem:[%s181 + $0x88] sm:$0xff]
        %v219 = vld [vmem:[%s181 + $0x90] sm:$0xff]
        %v220 = vld [vmem:[%s181 + $0x98] sm:$0xff]
        %v221 = vld [vmem:[%s181 + $0xa0] sm:$0xff]
        %v222 = vld [vmem:[%s181 + $0xa8] sm:$0xff]
        %v223 = vld [vmem:[%s181 + $0xb0] sm:$0xff]
        %v224 = vld [vmem:[%s181 + $0xb8] sm:$0xff]
        %v225 = vld [vmem:[%s181 + $0xc0] sm:$0xff]
        %v226 = vld [vmem:[%s181 + $0xc8] sm:$0xff]
        %v227 = vld [vmem:[%s181 + $0xd0] sm:$0xff]
        %v228 = vld [vmem:[%s181 + $0xd8] sm:$0xff]
        %v229 = vld [vmem:[%s181 + $0xe0] sm:$0xff]
        %v230 = vld [vmem:[%s181 + $0xe8] sm:$0xff]
        %v231 = vld [vmem:[%s181 + $0xf0] sm:$0xff]
        %v232 = vld [vmem:[%s181 + $0xf8] sm:$0xff]
        %v233 = vld [vmem:[%s181 + $0x100] sm:$0xff]
        %v234 = vld [vmem:[%s181 + $0x108] sm:$0xff]
        %v235 = vld [vmem:[%s181 + $0x110] sm:$0xff]
        %v236 = vld [vmem:[%s181 + $0x118] sm:$0xff]
        %v237 = vld [vmem:[%s181 + $0x120] sm:$0xff]
        %v238 = vld [vmem:[%s181 + $0x128] sm:$0xff]
        %v239 = vld [vmem:[%s181 + $0x130] sm:$0xff]
        %v240 = vld [vmem:[%s181 + $0x138] sm:$0xff]
        %v241 = vld [vmem:[%s181 + $0x140] sm:$0xff]
        %v242 = vld [vmem:[%s181 + $0x148] sm:$0xff]
        %v243 = vld [vmem:[%s181 + $0x150] sm:$0xff]
        %v244 = vld [vmem:[%s181 + $0x158] sm:$0xff]
        %v245 = vld [vmem:[%s181 + $0x160] sm:$0xff]
        %v246 = vld [vmem:[%s181 + $0x168] sm:$0xff]
        %v247 = vld [vmem:[%s181 + $0x170] sm:$0xff]
        %v248 = vld [vmem:[%s181 + $0x178] sm:$0xff]
        %v249 = vld [vmem:[%s181 + $0x180] sm:$0xff]
        %v250 = vld [vmem:[%s181 + $0x188] sm:$0xff]
        %v251 = vld [vmem:[%s181 + $0x190] sm:$0xff]
        %v252 = vld [vmem:[%s181 + $0x198] sm:$0xff]
        %v253 = vld [vmem:[%s181 + $0x1a0] sm:$0xff]
        %v254 = vld [vmem:[%s181 + $0x1a8] sm:$0xff]
        %v255 = vld [vmem:[%s181 + $0x1b0] sm:$0xff]
        %v256 = vld [vmem:[%s181 + $0x1b8] sm:$0xff]
        %v257 = vld [vmem:[%s181 + $0x1c0] sm:$0xff]
        %v258 = vld [vmem:[%s181 + $0x1c8] sm:$0xff]
        %v259 = vld [vmem:[%s181 + $0x1d0] sm:$0xff]
        %v260 = vld [vmem:[%s181 + $0x1d8] sm:$0xff]
        %v261 = vld [vmem:[%s181 + $0x1e0] sm:$0xff]
        %v262 = vld [vmem:[%s181 + $0x1e8] sm:$0xff]
        %v263 = vld [vmem:[%s181 + $0x1f0] sm:$0xff]
        %v264 = vld [vmem:[%s181 + $0x1f8] sm:$0xff]
        %v265 = vadd.f32 %v201, %v202
        %266 = vadd.xlane.f32.xlu0 %v265
        %v267 = vpop.xlane.xlu0 %266
        %v268 = vadd.f32 %v203, %v204
        %269 = vadd.xlane.f32.xlu0 %v268
        %v270 = vpop.xlane.xlu0 %269
        %v271 = vadd.f32 %v205, %v206
        %272 = vadd.xlane.f32.xlu0 %v271
        %v273 = vpop.xlane.xlu0 %272
        %v274 = vadd.f32 %v207, %v208
        %275 = vadd.xlane.f32.xlu0 %v274
        %v276 = vpop.xlane.xlu0 %275
        %v277 = vadd.f32 %v209, %v210
        %278 = vadd.xlane.f32.xlu0 %v277
        %v279 = vpop.xlane.xlu0 %278
        %v280 = vadd.f32 %v211, %v212
        %281 = vadd.xlane.f32.xlu0 %v280
        %v282 = vpop.xlane.xlu0 %281
        %v283 = vadd.f32 %v213, %v214
        %284 = vadd.xlane.f32.xlu0 %v283
        %v285 = vpop.xlane.xlu0 %284
        %v286 = vadd.f32 %v215, %v216
        %287 = vadd.xlane.f32.xlu0 %v286
        %v288 = vpop.xlane.xlu0 %287
        %v289 = vadd.f32 %v217, %v218
        %290 = vadd.xlane.f32.xlu0 %v289
        %v291 = vpop.xlane.xlu0 %290
        %v292 = vadd.f32 %v219, %v220
        %293 = vadd.xlane.f32.xlu0 %v292
        %v294 = vpop.xlane.xlu0 %293
        %v295 = vadd.f32 %v221, %v222
        %296 = vadd.xlane.f32.xlu0 %v295
        %v297 = vpop.xlane.xlu0 %296
        %v298 = vadd.f32 %v223, %v224
        %299 = vadd.xlane.f32.xlu0 %v298
        %v300 = vpop.xlane.xlu0 %299
        %v301 = vadd.f32 %v225, %v226
        %302 = vadd.xlane.f32.xlu0 %v301
        %v303 = vpop.xlane.xlu0 %302
        %v304 = vadd.f32 %v227, %v228
        %305 = vadd.xlane.f32.xlu0 %v304
        %v306 = vpop.xlane.xlu0 %305
        %v307 = vadd.f32 %v229, %v230
        %308 = vadd.xlane.f32.xlu0 %v307
        %v309 = vpop.xlane.xlu0 %308
        %v310 = vadd.f32 %v231, %v232
        %311 = vadd.xlane.f32.xlu0 %v310
        %v312 = vpop.xlane.xlu0 %311
        %v313 = vadd.f32 %v233, %v234
        %314 = vadd.xlane.f32.xlu0 %v313
        %v315 = vpop.xlane.xlu0 %314
        %v316 = vadd.f32 %v235, %v236
        %317 = vadd.xlane.f32.xlu0 %v316
        %v318 = vpop.xlane.xlu0 %317
        %v319 = vadd.f32 %v237, %v238
        %320 = vadd.xlane.f32.xlu0 %v319
        %v321 = vpop.xlane.xlu0 %320
        %v322 = vadd.f32 %v239, %v240
        %323 = vadd.xlane.f32.xlu0 %v322
        %v324 = vpop.xlane.xlu0 %323
        %v325 = vadd.f32 %v241, %v242
        %326 = vadd.xlane.f32.xlu0 %v325
        %v327 = vpop.xlane.xlu0 %326
        %v328 = vadd.f32 %v243, %v244
        %329 = vadd.xlane.f32.xlu0 %v328
        %v330 = vpop.xlane.xlu0 %329
        %v331 = vadd.f32 %v245, %v246
        %332 = vadd.xlane.f32.xlu0 %v331
        %v333 = vpop.xlane.xlu0 %332
        %v334 = vadd.f32 %v247, %v248
        %335 = vadd.xlane.f32.xlu0 %v334
        %v336 = vpop.xlane.xlu0 %335
        %v337 = vadd.f32 %v249, %v250
        %338 = vadd.xlane.f32.xlu0 %v337
        %v339 = vpop.xlane.xlu0 %338
        %v340 = vadd.f32 %v251, %v252
        %341 = vadd.xlane.f32.xlu0 %v340
        %v342 = vpop.xlane.xlu0 %341
        %v343 = vadd.f32 %v253, %v254
        %344 = vadd.xlane.f32.xlu0 %v343
        %v345 = vpop.xlane.xlu0 %344
        %v346 = vadd.f32 %v255, %v256
        %347 = vadd.xlane.f32.xlu0 %v346
        %v348 = vpop.xlane.xlu0 %347
        %v349 = vadd.f32 %v257, %v258
        %350 = vadd.xlane.f32.xlu0 %v349
        %v351 = vpop.xlane.xlu0 %350
        %v352 = vadd.f32 %v259, %v260
        %353 = vadd.xlane.f32.xlu0 %v352
        %v354 = vpop.xlane.xlu0 %353
        %v355 = vadd.f32 %v261, %v262
        %356 = vadd.xlane.f32.xlu0 %v355
        %v357 = vpop.xlane.xlu0 %356
        %v358 = vadd.f32 %v263, %v264
        %359 = vadd.xlane.f32.xlu0 %v358
        %v360 = vpop.xlane.xlu0 %359
        %v361 = vld [vmem:[#allocation2] sm:$0x3]
        %v394 = vlaneseq
        %v395 = vand.u32 %v394, 127
        %v396 = vlaneseq
        %v397 = vshrl.u32 %v396, 7
        %v398 = vsub.s32 %v395, %v397
        %v399 = vrot.slane %v267, %v398
        %v400 = vadd.s32 %v395, 4294967288
        %v401 = vlaneseq
        %v402 = vshrl.u32 %v401, 7
        %v403 = vsub.s32 %v400, %v402
        %v404 = vrot.slane %v270, %v403
        %vm405 = vcmask 130112
        %v406 = vsel %vm405, %v404, %v399
        %v407 = vadd.s32 %v395, 4294967280
        %v408 = vlaneseq
        %v409 = vshrl.u32 %v408, 7
        %v410 = vsub.s32 %v407, %v409
        %v411 = vrot.slane %v273, %v410
        %vm412 = vcmask 195712
        %v413 = vsel %vm412, %v411, %v406
        %v414 = vadd.s32 %v395, 4294967272
        %v415 = vlaneseq
        %v416 = vshrl.u32 %v415, 7
        %v417 = vsub.s32 %v414, %v416
        %v418 = vrot.slane %v276, %v417
        %vm419 = vcmask 261312
        %v420 = vsel %vm419, %v418, %v413
        %v421 = vadd.s32 %v395, 4294967264
        %v422 = vlaneseq
        %v423 = vshrl.u32 %v422, 7
        %v424 = vsub.s32 %v421, %v423
        %v425 = vrot.slane %v279, %v424
        %vm426 = vcmask 326912
        %v427 = vsel %vm426, %v425, %v420
        %v428 = vadd.s32 %v395, 4294967256
        %v429 = vlaneseq
        %v430 = vshrl.u32 %v429, 7
        %v431 = vsub.s32 %v428, %v430
        %v432 = vrot.slane %v282, %v431
        %vm433 = vcmask 392512
        %v434 = vsel %vm433, %v432, %v427
        %v435 = vadd.s32 %v395, 4294967248
        %v436 = vlaneseq
        %v437 = vshrl.u32 %v436, 7
        %v438 = vsub.s32 %v435, %v437
        %v439 = vrot.slane %v285, %v438
        %vm440 = vcmask 458112
        %v441 = vsel %vm440, %v439, %v434
        %v442 = vadd.s32 %v395, 4294967240
        %v443 = vlaneseq
        %v444 = vshrl.u32 %v443, 7
        %v445 = vsub.s32 %v442, %v444
        %v446 = vrot.slane %v288, %v445
        %vm447 = vcmask 523712
        %v448 = vsel %vm447, %v446, %v441
        %v449 = vadd.s32 %v395, 4294967232
        %v450 = vlaneseq
        %v451 = vshrl.u32 %v450, 7
        %v452 = vsub.s32 %v449, %v451
        %v453 = vrot.slane %v291, %v452
        %vm454 = vcmask 589312
        %v455 = vsel %vm454, %v453, %v448
        %v456 = vadd.s32 %v395, 4294967224
        %v457 = vlaneseq
        %v458 = vshrl.u32 %v457, 7
        %v459 = vsub.s32 %v456, %v458
        %v460 = vrot.slane %v294, %v459
        %vm461 = vcmask 654912
        %v462 = vsel %vm461, %v460, %v455
        %v463 = vadd.s32 %v395, 4294967216
        %v464 = vlaneseq
        %v465 = vshrl.u32 %v464, 7
        %v466 = vsub.s32 %v463, %v465
        %v467 = vrot.slane %v297, %v466
        %vm468 = vcmask 720512
        %v469 = vsel %vm468, %v467, %v462
        %v470 = vadd.s32 %v395, 4294967208
        %v471 = vlaneseq
        %v472 = vshrl.u32 %v471, 7
        %v473 = vsub.s32 %v470, %v472
        %v474 = vrot.slane %v300, %v473
        %vm475 = vcmask 786112
        %v476 = vsel %vm475, %v474, %v469
        %v477 = vadd.s32 %v395, 4294967200
        %v478 = vlaneseq
        %v479 = vshrl.u32 %v478, 7
        %v480 = vsub.s32 %v477, %v479
        %v481 = vrot.slane %v303, %v480
        %vm482 = vcmask 851712
        %v483 = vsel %vm482, %v481, %v476
        %v484 = vadd.s32 %v395, 4294967192
        %v485 = vlaneseq
        %v486 = vshrl.u32 %v485, 7
        %v487 = vsub.s32 %v484, %v486
        %v488 = vrot.slane %v306, %v487
        %vm489 = vcmask 917312
        %v490 = vsel %vm489, %v488, %v483
        %v491 = vadd.s32 %v395, 4294967184
        %v492 = vlaneseq
        %v493 = vshrl.u32 %v492, 7
        %v494 = vsub.s32 %v491, %v493
        %v495 = vrot.slane %v309, %v494
        %vm496 = vcmask 982912
        %v497 = vsel %vm496, %v495, %v490
        %v498 = vadd.s32 %v395, 4294967176
        %v499 = vlaneseq
        %v500 = vshrl.u32 %v499, 7
        %v501 = vsub.s32 %v498, %v500
        %v502 = vrot.slane %v312, %v501
        %vm503 = vcmask 1048512
        %v504 = vsel %vm503, %v502, %v497
        %v505 = vlaneseq
        %v506 = vshrl.u32 %v505, 7
        %v507 = vsub.s32 %v395, %v506
        %v508 = vrot.slane %v315, %v507
        %v509 = vlaneseq
        %v510 = vshrl.u32 %v509, 7
        %v511 = vsub.s32 %v400, %v510
        %v512 = vrot.slane %v318, %v511
        %v513 = vsel %vm405, %v512, %v508
        %v514 = vlaneseq
        %v515 = vshrl.u32 %v514, 7
        %v516 = vsub.s32 %v407, %v515
        %v517 = vrot.slane %v321, %v516
        %v518 = vsel %vm412, %v517, %v513
        %v519 = vlaneseq
        %v520 = vshrl.u32 %v519, 7
        %v521 = vsub.s32 %v414, %v520
        %v522 = vrot.slane %v324, %v521
        %v523 = vsel %vm419, %v522, %v518
        %v524 = vlaneseq
        %v525 = vshrl.u32 %v524, 7
        %v526 = vsub.s32 %v421, %v525
        %v527 = vrot.slane %v327, %v526
        %v528 = vsel %vm426, %v527, %v523
        %v529 = vlaneseq
        %v530 = vshrl.u32 %v529, 7
        %v531 = vsub.s32 %v428, %v530
        %v532 = vrot.slane %v330, %v531
        %v533 = vsel %vm433, %v532, %v528
        %v534 = vlaneseq
        %v535 = vshrl.u32 %v534, 7
        %v536 = vsub.s32 %v435, %v535
        %v537 = vrot.slane %v333, %v536
        %v538 = vsel %vm440, %v537, %v533
        %v539 = vlaneseq
        %v540 = vshrl.u32 %v539, 7
        %v541 = vsub.s32 %v442, %v540
        %v542 = vrot.slane %v336, %v541
        %v543 = vsel %vm447, %v542, %v538
        %v544 = vlaneseq
        %v545 = vshrl.u32 %v544, 7
        %v546 = vsub.s32 %v449, %v545
        %v547 = vrot.slane %v339, %v546
        %v548 = vsel %vm454, %v547, %v543
        %v549 = vlaneseq
        %v550 = vshrl.u32 %v549, 7
        %v551 = vsub.s32 %v456, %v550
        %v552 = vrot.slane %v342, %v551
        %v553 = vsel %vm461, %v552, %v548
        %v554 = vlaneseq
        %v555 = vshrl.u32 %v554, 7
        %v556 = vsub.s32 %v463, %v555
        %v557 = vrot.slane %v345, %v556
        %v558 = vsel %vm468, %v557, %v553
        %v559 = vlaneseq
        %v560 = vshrl.u32 %v559, 7
        %v561 = vsub.s32 %v470, %v560
        %v562 = vrot.slane %v348, %v561
        %v563 = vsel %vm475, %v562, %v558
        %v564 = vlaneseq
        %v565 = vshrl.u32 %v564, 7
        %v566 = vsub.s32 %v477, %v565
        %v567 = vrot.slane %v351, %v566
        %v568 = vsel %vm482, %v567, %v563
        %v569 = vlaneseq
        %v570 = vshrl.u32 %v569, 7
        %v571 = vsub.s32 %v484, %v570
        %v572 = vrot.slane %v354, %v571
        %v573 = vsel %vm489, %v572, %v568
        %v574 = vlaneseq
        %v575 = vshrl.u32 %v574, 7
        %v576 = vsub.s32 %v491, %v575
        %v577 = vrot.slane %v357, %v576
        %v578 = vsel %vm496, %v577, %v573
        %v579 = vlaneseq
        %v580 = vshrl.u32 %v579, 7
        %v581 = vsub.s32 %v498, %v580
        %v582 = vrot.slane %v360, %v581
        %v583 = vsel %vm503, %v582, %v578
        %vm584 = vcmask 1041409
        %v585 = vsel %vm584, %v583, %v504
        %v587 = vadd.f32 %v361, %v585
        %588 = vst [vmem:[#allocation2] sm:$0x3] %v587
      $region40: #{se_attention_forward.1} parent=31 // pred_fallthru
        _
      // Predicated region
      $region41: #{se_attention_forward.1} parent=31 // pred_check
        _
      $region42: #{se_attention_forward.1} parent=31 // pred_check_branch
        %590 = sbr.rel (%p193) target = $region44
      $region43: #{se_attention_forward.1} parent=31 // pred_region
        %v591 = vld [vmem:[#allocation2] sm:$0xff]
        %v592 = vmul.f32 %v591, 0.00390625
        %v593 = vld [vmem:[%s1] sm:$0xff]
        %v594 = vld [vmem:[%s1 + $0x8] sm:$0xff]
        %v595 = vld [vmem:[%s1 + $0x10] sm:$0xff]
        %v596 = vld [vmem:[%s1 + $0x18] sm:$0xff]
        %v597 = vld [vmem:[%s1 + $0x20] sm:$0xff]
        %v598 = vld [vmem:[%s1 + $0x28] sm:$0xff]
        %v599 = vld [vmem:[%s1 + $0x30] sm:$0xff]
        %v600 = vld [vmem:[%s1 + $0x38] sm:$0xff]
        %v601 = vld [vmem:[%s1 + $0x40] sm:$0xff]
        %v602 = vld [vmem:[%s1 + $0x48] sm:$0xff]
        %v603 = vld [vmem:[%s1 + $0x50] sm:$0xff]
        %v604 = vld [vmem:[%s1 + $0x58] sm:$0xff]
        %v605 = vld [vmem:[%s1 + $0x60] sm:$0xff]
        %v606 = vld [vmem:[%s1 + $0x68] sm:$0xff]
        %v607 = vld [vmem:[%s1 + $0x70] sm:$0xff]
        %v608 = vld [vmem:[%s1 + $0x78] sm:$0xff]
        %609 = vmatprep.subr.mxu0 0.0
        %v610 = vand.u32 %v593, 4294901760
        %611 = vmatpush1.msra.mxu0 %v610
        %612 = vmatprep.subr.mxu0 0.0
        %v613 = vand.u32 %v594, 4294901760
        %614 = vmatpush1.msra.mxu0 %v613
        %615 = vmatprep.subr.mxu0 0.0
        %v616 = vand.u32 %v595, 4294901760
        %617 = vmatpush1.msra.mxu0 %v616
        %618 = vmatprep.subr.mxu0 0.0
        %v619 = vand.u32 %v596, 4294901760
        %620 = vmatpush1.msra.mxu0 %v619
        %621 = vmatprep.subr.mxu0 0.0
        %v622 = vand.u32 %v597, 4294901760
        %623 = vmatpush1.msra.mxu0 %v622
        %624 = vmatprep.subr.mxu0 0.0
        %v625 = vand.u32 %v598, 4294901760
        %626 = vmatpush1.msra.mxu0 %v625
        %627 = vmatprep.subr.mxu0 0.0
        %v628 = vand.u32 %v599, 4294901760
        %629 = vmatpush1.msra.mxu0 %v628
        %630 = vmatprep.subr.mxu0 0.0
        %v631 = vand.u32 %v600, 4294901760
        %632 = vmatpush1.msra.mxu0 %v631
        %633 = vmatprep.subr.mxu0 0.0
        %v634 = vand.u32 %v601, 4294901760
        %635 = vmatpush1.msra.mxu0 %v634
        %636 = vmatprep.subr.mxu0 0.0
        %v637 = vand.u32 %v602, 4294901760
        %638 = vmatpush1.msra.mxu0 %v637
        %639 = vmatprep.subr.mxu0 0.0
        %v640 = vand.u32 %v603, 4294901760
        %641 = vmatpush1.msra.mxu0 %v640
        %642 = vmatprep.subr.mxu0 0.0
        %v643 = vand.u32 %v604, 4294901760
        %644 = vmatpush1.msra.mxu0 %v643
        %645 = vmatprep.subr.mxu0 0.0
        %v646 = vand.u32 %v605, 4294901760
        %647 = vmatpush1.msra.mxu0 %v646
        %648 = vmatprep.subr.mxu0 0.0
        %v649 = vand.u32 %v606, 4294901760
        %650 = vmatpush1.msra.mxu0 %v649
        %651 = vmatprep.subr.mxu0 0.0
        %v652 = vand.u32 %v607, 4294901760
        %653 = vmatpush1.msra.mxu0 %v652
        %654 = vmatprep.subr.mxu0 0.0
        %v655 = vand.u32 %v608, 4294901760
        %656 = vmatpush1.msra.mxu0 %v655
        %657 = vmatprep.subr.mxu0 0.0
        %658 = vmatpush1.msra.mxu0 0.0
        %659 = vmatprep.subr.mxu0 0.0
        %660 = vmatpush1.msra.mxu0 0.0
        %661 = vmatprep.subr.mxu0 0.0
        %662 = vmatpush1.msra.mxu0 0.0
        %663 = vmatprep.subr.mxu0 0.0
        %664 = vmatpush1.msra.mxu0 0.0
        %665 = vmatprep.subr.mxu0 0.0
        %666 = vmatpush1.msra.mxu0 0.0
        %667 = vmatprep.subr.mxu0 0.0
        %668 = vmatpush1.msra.mxu0 0.0
        %669 = vmatprep.subr.mxu0 0.0
        %670 = vmatpush1.msra.mxu0 0.0
        %671 = vmatprep.subr.mxu0 0.0
        %672 = vmatpush1.msra.mxu0 0.0
        %673 = vmatprep.subr.mxu0 0.0
        %674 = vmatpush1.msra.mxu0 0.0
        %675 = vmatprep.subr.mxu0 0.0
        %676 = vmatpush1.msra.mxu0 0.0
        %677 = vmatprep.subr.mxu0 0.0
        %678 = vmatpush1.msra.mxu0 0.0
        %679 = vmatprep.subr.mxu0 0.0
        %680 = vmatpush1.msra.mxu0 0.0
        %681 = vmatprep.subr.mxu0 0.0
        %682 = vmatpush1.msra.mxu0 0.0
        %683 = vmatprep.subr.mxu0 0.0
        %684 = vmatpush1.msra.mxu0 0.0
        %685 = vmatprep.subr.mxu0 0.0
        %686 = vmatpush1.msra.mxu0 0.0
        %687 = vmatprep.subr.mxu0 0.0
        %688 = vmatpush1.msra.mxu0 0.0
        %689 = vmatprep.mubr.f32.mxu0 0.0
        %v690 = vand.u32 %v592, 4294901760
        %v691 = vsub.f32 %v592, %v690
        %v692 = vand.u32 %v691, 4294901760
        %v693 = vsub.f32 %v691, %v692
        %v694 = vand.u32 %v693, 4294901760
        %695 = vmatmul.mubr.f32.gmra.mrb[0].mxu0 %v694
        %v696 = vpop.f32.mrb[0].mxu0
        %v697 = vadd.f32 0.0, %v696
        %v698 = vpop.f32.mrb[0].mxu0
        %699 = vdwg.mxu0
        %700 = vmatprep.subr.mxu0 0.0
        %v701 = vand.u32 %v593, 4294901760
        %v702 = vsub.f32 %v593, %v701
        %v703 = vand.u32 %v702, 4294901760
        %v704 = vsub.f32 %v702, %v703
        %v705 = vand.u32 %v704, 4294901760
        %706 = vmatpush1.msra.mxu0 %v705
        %707 = vmatprep.subr.mxu0 0.0
        %v708 = vand.u32 %v594, 4294901760
        %v709 = vsub.f32 %v594, %v708
        %v710 = vand.u32 %v709, 4294901760
        %v711 = vsub.f32 %v709, %v710
        %v712 = vand.u32 %v711, 4294901760
        %713 = vmatpush1.msra.mxu0 %v712
        %714 = vmatprep.subr.mxu0 0.0
        %v715 = vand.u32 %v595, 4294901760
        %v716 = vsub.f32 %v595, %v715
        %v717 = vand.u32 %v716, 4294901760
        %v718 = vsub.f32 %v716, %v717
        %v719 = vand.u32 %v718, 4294901760
        %720 = vmatpush1.msra.mxu0 %v719
        %721 = vmatprep.subr.mxu0 0.0
        %v722 = vand.u32 %v596, 4294901760
        %v723 = vsub.f32 %v596, %v722
        %v724 = vand.u32 %v723, 4294901760
        %v725 = vsub.f32 %v723, %v724
        %v726 = vand.u32 %v725, 4294901760
        %727 = vmatpush1.msra.mxu0 %v726
        %728 = vmatprep.subr.mxu0 0.0
        %v729 = vand.u32 %v597, 4294901760
        %v730 = vsub.f32 %v597, %v729
        %v731 = vand.u32 %v730, 4294901760
        %v732 = vsub.f32 %v730, %v731
        %v733 = vand.u32 %v732, 4294901760
        %734 = vmatpush1.msra.mxu0 %v733
        %735 = vmatprep.subr.mxu0 0.0
        %v736 = vand.u32 %v598, 4294901760
        %v737 = vsub.f32 %v598, %v736
        %v738 = vand.u32 %v737, 4294901760
        %v739 = vsub.f32 %v737, %v738
        %v740 = vand.u32 %v739, 4294901760
        %741 = vmatpush1.msra.mxu0 %v740
        %742 = vmatprep.subr.mxu0 0.0
        %v743 = vand.u32 %v599, 4294901760
        %v744 = vsub.f32 %v599, %v743
        %v745 = vand.u32 %v744, 4294901760
        %v746 = vsub.f32 %v744, %v745
        %v747 = vand.u32 %v746, 4294901760
        %748 = vmatpush1.msra.mxu0 %v747
        %749 = vmatprep.subr.mxu0 0.0
        %v750 = vand.u32 %v600, 4294901760
        %v751 = vsub.f32 %v600, %v750
        %v752 = vand.u32 %v751, 4294901760
        %v753 = vsub.f32 %v751, %v752
        %v754 = vand.u32 %v753, 4294901760
        %755 = vmatpush1.msra.mxu0 %v754
        %756 = vmatprep.subr.mxu0 0.0
        %v757 = vand.u32 %v601, 4294901760
        %v758 = vsub.f32 %v601, %v757
        %v759 = vand.u32 %v758, 4294901760
        %v760 = vsub.f32 %v758, %v759
        %v761 = vand.u32 %v760, 4294901760
        %762 = vmatpush1.msra.mxu0 %v761
        %763 = vmatprep.subr.mxu0 0.0
        %v764 = vand.u32 %v602, 4294901760
        %v765 = vsub.f32 %v602, %v764
        %v766 = vand.u32 %v765, 4294901760
        %v767 = vsub.f32 %v765, %v766
        %v768 = vand.u32 %v767, 4294901760
        %769 = vmatpush1.msra.mxu0 %v768
        %770 = vmatprep.subr.mxu0 0.0
        %v771 = vand.u32 %v603, 4294901760
        %v772 = vsub.f32 %v603, %v771
        %v773 = vand.u32 %v772, 4294901760
        %v774 = vsub.f32 %v772, %v773
        %v775 = vand.u32 %v774, 4294901760
        %776 = vmatpush1.msra.mxu0 %v775
        %777 = vmatprep.subr.mxu0 0.0
        %v778 = vand.u32 %v604, 4294901760
        %v779 = vsub.f32 %v604, %v778
        %v780 = vand.u32 %v779, 4294901760
        %v781 = vsub.f32 %v779, %v780
        %v782 = vand.u32 %v781, 4294901760
        %783 = vmatpush1.msra.mxu0 %v782
        %784 = vmatprep.subr.mxu0 0.0
        %v785 = vand.u32 %v605, 4294901760
        %v786 = vsub.f32 %v605, %v785
        %v787 = vand.u32 %v786, 4294901760
        %v788 = vsub.f32 %v786, %v787
        %v789 = vand.u32 %v788, 4294901760
        %790 = vmatpush1.msra.mxu0 %v789
        %791 = vmatprep.subr.mxu0 0.0
        %v792 = vand.u32 %v606, 4294901760
        %v793 = vsub.f32 %v606, %v792
        %v794 = vand.u32 %v793, 4294901760
        %v795 = vsub.f32 %v793, %v794
        %v796 = vand.u32 %v795, 4294901760
        %797 = vmatpush1.msra.mxu0 %v796
        %798 = vmatprep.subr.mxu0 0.0
        %v799 = vand.u32 %v607, 4294901760
        %v800 = vsub.f32 %v607, %v799
        %v801 = vand.u32 %v800, 4294901760
        %v802 = vsub.f32 %v800, %v801
        %v803 = vand.u32 %v802, 4294901760
        %804 = vmatpush1.msra.mxu0 %v803
        %805 = vmatprep.subr.mxu0 0.0
        %v806 = vand.u32 %v608, 4294901760
        %v807 = vsub.f32 %v608, %v806
        %v808 = vand.u32 %v807, 4294901760
        %v809 = vsub.f32 %v807, %v808
        %v810 = vand.u32 %v809, 4294901760
        %811 = vmatpush1.msra.mxu0 %v810
        %812 = vmatprep.subr.mxu0 0.0
        %813 = vmatpush1.msra.mxu0 0.0
        %814 = vmatprep.subr.mxu0 0.0
        %815 = vmatpush1.msra.mxu0 0.0
        %816 = vmatprep.subr.mxu0 0.0
        %817 = vmatpush1.msra.mxu0 0.0
        %818 = vmatprep.subr.mxu0 0.0
        %819 = vmatpush1.msra.mxu0 0.0
        %820 = vmatprep.subr.mxu0 0.0
        %821 = vmatpush1.msra.mxu0 0.0
        %822 = vmatprep.subr.mxu0 0.0
        %823 = vmatpush1.msra.mxu0 0.0
        %824 = vmatprep.subr.mxu0 0.0
        %825 = vmatpush1.msra.mxu0 0.0
        %826 = vmatprep.subr.mxu0 0.0
        %827 = vmatpush1.msra.mxu0 0.0
        %828 = vmatprep.subr.mxu0 0.0
        %829 = vmatpush1.msra.mxu0 0.0
        %830 = vmatprep.subr.mxu0 0.0
        %831 = vmatpush1.msra.mxu0 0.0
        %832 = vmatprep.subr.mxu0 0.0
        %833 = vmatpush1.msra.mxu0 0.0
        %834 = vmatprep.subr.mxu0 0.0
        %835 = vmatpush1.msra.mxu0 0.0
        %836 = vmatprep.subr.mxu0 0.0
        %837 = vmatpush1.msra.mxu0 0.0
        %838 = vmatprep.subr.mxu0 0.0
        %839 = vmatpush1.msra.mxu0 0.0
        %840 = vmatprep.subr.mxu0 0.0
        %841 = vmatpush1.msra.mxu0 0.0
        %842 = vmatprep.subr.mxu0 0.0
        %843 = vmatpush1.msra.mxu0 0.0
        %844 = vmatprep.mubr.f32.mxu0 0.0
        %v845 = vand.u32 %v592, 4294901760
        %846 = vmatmul.mubr.f32.gmra.mrb[0].mxu0 %v845
        %v847 = vpop.f32.mrb[0].mxu0
        %v848 = vadd.f32 %v697, %v847
        %v849 = vpop.f32.mrb[0].mxu0
        %850 = vdwg.mxu0
        %851 = vmatprep.subr.mxu0 0.0
        %v852 = vand.u32 %v593, 4294901760
        %v853 = vsub.f32 %v593, %v852
        %854 = vmatpush1.msra.mxu0 %v853
        %855 = vmatprep.subr.mxu0 0.0
        %v856 = vand.u32 %v594, 4294901760
        %v857 = vsub.f32 %v594, %v856
        %858 = vmatpush1.msra.mxu0 %v857
        %859 = vmatprep.subr.mxu0 0.0
        %v860 = vand.u32 %v595, 4294901760
        %v861 = vsub.f32 %v595, %v860
        %862 = vmatpush1.msra.mxu0 %v861
        %863 = vmatprep.subr.mxu0 0.0
        %v864 = vand.u32 %v596, 4294901760
        %v865 = vsub.f32 %v596, %v864
        %866 = vmatpush1.msra.mxu0 %v865
        %867 = vmatprep.subr.mxu0 0.0
        %v868 = vand.u32 %v597, 4294901760
        %v869 = vsub.f32 %v597, %v868
        %870 = vmatpush1.msra.mxu0 %v869
        %871 = vmatprep.subr.mxu0 0.0
        %v872 = vand.u32 %v598, 4294901760
        %v873 = vsub.f32 %v598, %v872
        %874 = vmatpush1.msra.mxu0 %v873
        %875 = vmatprep.subr.mxu0 0.0
        %v876 = vand.u32 %v599, 4294901760
        %v877 = vsub.f32 %v599, %v876
        %878 = vmatpush1.msra.mxu0 %v877
        %879 = vmatprep.subr.mxu0 0.0
        %v880 = vand.u32 %v600, 4294901760
        %v881 = vsub.f32 %v600, %v880
        %882 = vmatpush1.msra.mxu0 %v881
        %883 = vmatprep.subr.mxu0 0.0
        %v884 = vand.u32 %v601, 4294901760
        %v885 = vsub.f32 %v601, %v884
        %886 = vmatpush1.msra.mxu0 %v885
        %887 = vmatprep.subr.mxu0 0.0
        %v888 = vand.u32 %v602, 4294901760
        %v889 = vsub.f32 %v602, %v888
        %890 = vmatpush1.msra.mxu0 %v889
        %891 = vmatprep.subr.mxu0 0.0
        %v892 = vand.u32 %v603, 4294901760
        %v893 = vsub.f32 %v603, %v892
        %894 = vmatpush1.msra.mxu0 %v893
        %895 = vmatprep.subr.mxu0 0.0
        %v896 = vand.u32 %v604, 4294901760
        %v897 = vsub.f32 %v604, %v896
        %898 = vmatpush1.msra.mxu0 %v897
        %899 = vmatprep.subr.mxu0 0.0
        %v900 = vand.u32 %v605, 4294901760
        %v901 = vsub.f32 %v605, %v900
        %902 = vmatpush1.msra.mxu0 %v901
        %903 = vmatprep.subr.mxu0 0.0
        %v904 = vand.u32 %v606, 4294901760
        %v905 = vsub.f32 %v606, %v904
        %906 = vmatpush1.msra.mxu0 %v905
        %907 = vmatprep.subr.mxu0 0.0
        %v908 = vand.u32 %v607, 4294901760
        %v909 = vsub.f32 %v607, %v908
        %910 = vmatpush1.msra.mxu0 %v909
        %911 = vmatprep.subr.mxu0 0.0
        %v912 = vand.u32 %v608, 4294901760
        %v913 = vsub.f32 %v608, %v912
        %914 = vmatpush1.msra.mxu0 %v913
        %915 = vmatprep.subr.mxu0 0.0
        %916 = vmatpush1.msra.mxu0 0.0
        %917 = vmatprep.subr.mxu0 0.0
        %918 = vmatpush1.msra.mxu0 0.0
        %919 = vmatprep.subr.mxu0 0.0
        %920 = vmatpush1.msra.mxu0 0.0
        %921 = vmatprep.subr.mxu0 0.0
        %922 = vmatpush1.msra.mxu0 0.0
        %923 = vmatprep.subr.mxu0 0.0
        %924 = vmatpush1.msra.mxu0 0.0
        %925 = vmatprep.subr.mxu0 0.0
        %926 = vmatpush1.msra.mxu0 0.0
        %927 = vmatprep.subr.mxu0 0.0
        %928 = vmatpush1.msra.mxu0 0.0
        %929 = vmatprep.subr.mxu0 0.0
        %930 = vmatpush1.msra.mxu0 0.0
        %931 = vmatprep.subr.mxu0 0.0
        %932 = vmatpush1.msra.mxu0 0.0
        %933 = vmatprep.subr.mxu0 0.0
        %934 = vmatpush1.msra.mxu0 0.0
        %935 = vmatprep.subr.mxu0 0.0
        %936 = vmatpush1.msra.mxu0 0.0
        %937 = vmatprep.subr.mxu0 0.0
        %938 = vmatpush1.msra.mxu0 0.0
        %939 = vmatprep.subr.mxu0 0.0
        %940 = vmatpush1.msra.mxu0 0.0
        %941 = vmatprep.subr.mxu0 0.0
        %942 = vmatpush1.msra.mxu0 0.0
        %943 = vmatprep.subr.mxu0 0.0
        %944 = vmatpush1.msra.mxu0 0.0
        %945 = vmatprep.subr.mxu0 0.0
        %946 = vmatpush1.msra.mxu0 0.0
        %947 = vmatprep.mubr.f32.mxu0 0.0
        %v948 = vand.u32 %v592, 4294901760
        %v949 = vsub.f32 %v592, %v948
        %950 = vmatmul.mubr.f32.gmra.mrb[0].mxu0 %v949
        %v951 = vpop.f32.mrb[0].mxu0
        %v952 = vadd.f32 %v848, %v951
        %v953 = vpop.f32.mrb[0].mxu0
        %954 = vdwg.mxu0
        %955 = vmatprep.subr.mxu0 0.0
        %v956 = vand.u32 %v593, 4294901760
        %957 = vmatpush1.msra.mxu0 %v956
        %958 = vmatprep.subr.mxu0 0.0
        %v959 = vand.u32 %v594, 4294901760
        %960 = vmatpush1.msra.mxu0 %v959
        %961 = vmatprep.subr.mxu0 0.0
        %v962 = vand.u32 %v595, 4294901760
        %963 = vmatpush1.msra.mxu0 %v962
        %964 = vmatprep.subr.mxu0 0.0
        %v965 = vand.u32 %v596, 4294901760
        %966 = vmatpush1.msra.mxu0 %v965
        %967 = vmatprep.subr.mxu0 0.0
        %v968 = vand.u32 %v597, 4294901760
        %969 = vmatpush1.msra.mxu0 %v968
        %970 = vmatprep.subr.mxu0 0.0
        %v971 = vand.u32 %v598, 4294901760
        %972 = vmatpush1.msra.mxu0 %v971
        %973 = vmatprep.subr.mxu0 0.0
        %v974 = vand.u32 %v599, 4294901760
        %975 = vmatpush1.msra.mxu0 %v974
        %976 = vmatprep.subr.mxu0 0.0
        %v977 = vand.u32 %v600, 4294901760
        %978 = vmatpush1.msra.mxu0 %v977
        %979 = vmatprep.subr.mxu0 0.0
        %v980 = vand.u32 %v601, 4294901760
        %981 = vmatpush1.msra.mxu0 %v980
        %982 = vmatprep.subr.mxu0 0.0
        %v983 = vand.u32 %v602, 4294901760
        %984 = vmatpush1.msra.mxu0 %v983
        %985 = vmatprep.subr.mxu0 0.0
        %v986 = vand.u32 %v603, 4294901760
        %987 = vmatpush1.msra.mxu0 %v986
        %988 = vmatprep.subr.mxu0 0.0
        %v989 = vand.u32 %v604, 4294901760
        %990 = vmatpush1.msra.mxu0 %v989
        %991 = vmatprep.subr.mxu0 0.0
        %v992 = vand.u32 %v605, 4294901760
        %993 = vmatpush1.msra.mxu0 %v992
        %994 = vmatprep.subr.mxu0 0.0
        %v995 = vand.u32 %v606, 4294901760
        %996 = vmatpush1.msra.mxu0 %v995
        %997 = vmatprep.subr.mxu0 0.0
        %v998 = vand.u32 %v607, 4294901760
        %999 = vmatpush1.msra.mxu0 %v998
        %1000 = vmatprep.subr.mxu0 0.0
        %v1001 = vand.u32 %v608, 4294901760
        %1002 = vmatpush1.msra.mxu0 %v1001
        %1003 = vmatprep.subr.mxu0 0.0
        %1004 = vmatpush1.msra.mxu0 0.0
        %1005 = vmatprep.subr.mxu0 0.0
        %1006 = vmatpush1.msra.mxu0 0.0
        %1007 = vmatprep.subr.mxu0 0.0
        %1008 = vmatpush1.msra.mxu0 0.0
        %1009 = vmatprep.subr.mxu0 0.0
        %1010 = vmatpush1.msra.mxu0 0.0
        %1011 = vmatprep.subr.mxu0 0.0
        %1012 = vmatpush1.msra.mxu0 0.0
        %1013 = vmatprep.subr.mxu0 0.0
        %1014 = vmatpush1.msra.mxu0 0.0
        %1015 = vmatprep.subr.mxu0 0.0
        %1016 = vmatpush1.msra.mxu0 0.0
        %1017 = vmatprep.subr.mxu0 0.0
        %1018 = vmatpush1.msra.mxu0 0.0
        %1019 = vmatprep.subr.mxu0 0.0
        %1020 = vmatpush1.msra.mxu0 0.0
        %1021 = vmatprep.subr.mxu0 0.0
        %1022 = vmatpush1.msra.mxu0 0.0
        %1023 = vmatprep.subr.mxu0 0.0
        %1024 = vmatpush1.msra.mxu0 0.0
        %1025 = vmatprep.subr.mxu0 0.0
        %1026 = vmatpush1.msra.mxu0 0.0
        %1027 = vmatprep.subr.mxu0 0.0
        %1028 = vmatpush1.msra.mxu0 0.0
        %1029 = vmatprep.subr.mxu0 0.0
        %1030 = vmatpush1.msra.mxu0 0.0
        %1031 = vmatprep.subr.mxu0 0.0
        %1032 = vmatpush1.msra.mxu0 0.0
        %1033 = vmatprep.subr.mxu0 0.0
        %1034 = vmatpush1.msra.mxu0 0.0
        %1035 = vmatprep.mubr.f32.mxu0 0.0
        %v1036 = vand.u32 %v592, 4294901760
        %v1037 = vsub.f32 %v592, %v1036
        %v1038 = vand.u32 %v1037, 4294901760
        %1039 = vmatmul.mubr.f32.gmra.mrb[0].mxu0 %v1038
        %v1040 = vpop.f32.mrb[0].mxu0
        %v1041 = vadd.f32 %v952, %v1040
        %v1042 = vpop.f32.mrb[0].mxu0
        %1043 = vdwg.mxu0
        %1044 = vmatprep.subr.mxu0 0.0
        %v1045 = vand.u32 %v593, 4294901760
        %v1046 = vsub.f32 %v593, %v1045
        %v1047 = vand.u32 %v1046, 4294901760
        %1048 = vmatpush1.msra.mxu0 %v1047
        %1049 = vmatprep.subr.mxu0 0.0
        %v1050 = vand.u32 %v594, 4294901760
        %v1051 = vsub.f32 %v594, %v1050
        %v1052 = vand.u32 %v1051, 4294901760
        %1053 = vmatpush1.msra.mxu0 %v1052
        %1054 = vmatprep.subr.mxu0 0.0
        %v1055 = vand.u32 %v595, 4294901760
        %v1056 = vsub.f32 %v595, %v1055
        %v1057 = vand.u32 %v1056, 4294901760
        %1058 = vmatpush1.msra.mxu0 %v1057
        %1059 = vmatprep.subr.mxu0 0.0
        %v1060 = vand.u32 %v596, 4294901760
        %v1061 = vsub.f32 %v596, %v1060
        %v1062 = vand.u32 %v1061, 4294901760
        %1063 = vmatpush1.msra.mxu0 %v1062
        %1064 = vmatprep.subr.mxu0 0.0
        %v1065 = vand.u32 %v597, 4294901760
        %v1066 = vsub.f32 %v597, %v1065
        %v1067 = vand.u32 %v1066, 4294901760
        %1068 = vmatpush1.msra.mxu0 %v1067
        %1069 = vmatprep.subr.mxu0 0.0
        %v1070 = vand.u32 %v598, 4294901760
        %v1071 = vsub.f32 %v598, %v1070
        %v1072 = vand.u32 %v1071, 4294901760
        %1073 = vmatpush1.msra.mxu0 %v1072
        %1074 = vmatprep.subr.mxu0 0.0
        %v1075 = vand.u32 %v599, 4294901760
        %v1076 = vsub.f32 %v599, %v1075
        %v1077 = vand.u32 %v1076, 4294901760
        %1078 = vmatpush1.msra.mxu0 %v1077
        %1079 = vmatprep.subr.mxu0 0.0
        %v1080 = vand.u32 %v600, 4294901760
        %v1081 = vsub.f32 %v600, %v1080
        %v1082 = vand.u32 %v1081, 4294901760
        %1083 = vmatpush1.msra.mxu0 %v1082
        %1084 = vmatprep.subr.mxu0 0.0
        %v1085 = vand.u32 %v601, 4294901760
        %v1086 = vsub.f32 %v601, %v1085
        %v1087 = vand.u32 %v1086, 4294901760
        %1088 = vmatpush1.msra.mxu0 %v1087
        %1089 = vmatprep.subr.mxu0 0.0
        %v1090 = vand.u32 %v602, 4294901760
        %v1091 = vsub.f32 %v602, %v1090
        %v1092 = vand.u32 %v1091, 4294901760
        %1093 = vmatpush1.msra.mxu0 %v1092
        %1094 = vmatprep.subr.mxu0 0.0
        %v1095 = vand.u32 %v603, 4294901760
        %v1096 = vsub.f32 %v603, %v1095
        %v1097 = vand.u32 %v1096, 4294901760
        %1098 = vmatpush1.msra.mxu0 %v1097
        %1099 = vmatprep.subr.mxu0 0.0
        %v1100 = vand.u32 %v604, 4294901760
        %v1101 = vsub.f32 %v604, %v1100
        %v1102 = vand.u32 %v1101, 4294901760
        %1103 = vmatpush1.msra.mxu0 %v1102
        %1104 = vmatprep.subr.mxu0 0.0
        %v1105 = vand.u32 %v605, 4294901760
        %v1106 = vsub.f32 %v605, %v1105
        %v1107 = vand.u32 %v1106, 4294901760
        %1108 = vmatpush1.msra.mxu0 %v1107
        %1109 = vmatprep.subr.mxu0 0.0
        %v1110 = vand.u32 %v606, 4294901760
        %v1111 = vsub.f32 %v606, %v1110
        %v1112 = vand.u32 %v1111, 4294901760
        %1113 = vmatpush1.msra.mxu0 %v1112
        %1114 = vmatprep.subr.mxu0 0.0
        %v1115 = vand.u32 %v607, 4294901760
        %v1116 = vsub.f32 %v607, %v1115
        %v1117 = vand.u32 %v1116, 4294901760
        %1118 = vmatpush1.msra.mxu0 %v1117
        %1119 = vmatprep.subr.mxu0 0.0
        %v1120 = vand.u32 %v608, 4294901760
        %v1121 = vsub.f32 %v608, %v1120
        %v1122 = vand.u32 %v1121, 4294901760
        %1123 = vmatpush1.msra.mxu0 %v1122
        %1124 = vmatprep.subr.mxu0 0.0
        %1125 = vmatpush1.msra.mxu0 0.0
        %1126 = vmatprep.subr.mxu0 0.0
        %1127 = vmatpush1.msra.mxu0 0.0
        %1128 = vmatprep.subr.mxu0 0.0
        %1129 = vmatpush1.msra.mxu0 0.0
        %1130 = vmatprep.subr.mxu0 0.0
        %1131 = vmatpush1.msra.mxu0 0.0
        %1132 = vmatprep.subr.mxu0 0.0
        %1133 = vmatpush1.msra.mxu0 0.0
        %1134 = vmatprep.subr.mxu0 0.0
        %1135 = vmatpush1.msra.mxu0 0.0
        %1136 = vmatprep.subr.mxu0 0.0
        %1137 = vmatpush1.msra.mxu0 0.0
        %1138 = vmatprep.subr.mxu0 0.0
        %1139 = vmatpush1.msra.mxu0 0.0
        %1140 = vmatprep.subr.mxu0 0.0
        %1141 = vmatpush1.msra.mxu0 0.0
        %1142 = vmatprep.subr.mxu0 0.0
        %1143 = vmatpush1.msra.mxu0 0.0
        %1144 = vmatprep.subr.mxu0 0.0
        %1145 = vmatpush1.msra.mxu0 0.0
        %1146 = vmatprep.subr.mxu0 0.0
        %1147 = vmatpush1.msra.mxu0 0.0
        %1148 = vmatprep.subr.mxu0 0.0
        %1149 = vmatpush1.msra.mxu0 0.0
        %1150 = vmatprep.subr.mxu0 0.0
        %1151 = vmatpush1.msra.mxu0 0.0
        %1152 = vmatprep.subr.mxu0 0.0
        %1153 = vmatpush1.msra.mxu0 0.0
        %1154 = vmatprep.subr.mxu0 0.0
        %1155 = vmatpush1.msra.mxu0 0.0
        %1156 = vmatprep.mubr.f32.mxu0 0.0
        %v1157 = vand.u32 %v592, 4294901760
        %1158 = vmatmul.mubr.f32.gmra.mrb[0].mxu0 %v1157
        %v1159 = vpop.f32.mrb[0].mxu0
        %v1160 = vadd.f32 %v1041, %v1159
        %v1161 = vpop.f32.mrb[0].mxu0
        %1162 = vdwg.mxu0
        %1163 = vmatprep.subr.mxu0 0.0
        %v1164 = vand.u32 %v593, 4294901760
        %1165 = vmatpush1.msra.mxu0 %v1164
        %1166 = vmatprep.subr.mxu0 0.0
        %v1167 = vand.u32 %v594, 4294901760
        %1168 = vmatpush1.msra.mxu0 %v1167
        %1169 = vmatprep.subr.mxu0 0.0
        %v1170 = vand.u32 %v595, 4294901760
        %1171 = vmatpush1.msra.mxu0 %v1170
        %1172 = vmatprep.subr.mxu0 0.0
        %v1173 = vand.u32 %v596, 4294901760
        %1174 = vmatpush1.msra.mxu0 %v1173
        %1175 = vmatprep.subr.mxu0 0.0
        %v1176 = vand.u32 %v597, 4294901760
        %1177 = vmatpush1.msra.mxu0 %v1176
        %1178 = vmatprep.subr.mxu0 0.0
        %v1179 = vand.u32 %v598, 4294901760
        %1180 = vmatpush1.msra.mxu0 %v1179
        %1181 = vmatprep.subr.mxu0 0.0
        %v1182 = vand.u32 %v599, 4294901760
        %1183 = vmatpush1.msra.mxu0 %v1182
        %1184 = vmatprep.subr.mxu0 0.0
        %v1185 = vand.u32 %v600, 4294901760
        %1186 = vmatpush1.msra.mxu0 %v1185
        %1187 = vmatprep.subr.mxu0 0.0
        %v1188 = vand.u32 %v601, 4294901760
        %1189 = vmatpush1.msra.mxu0 %v1188
        %1190 = vmatprep.subr.mxu0 0.0
        %v1191 = vand.u32 %v602, 4294901760
        %1192 = vmatpush1.msra.mxu0 %v1191
        %1193 = vmatprep.subr.mxu0 0.0
        %v1194 = vand.u32 %v603, 4294901760
        %1195 = vmatpush1.msra.mxu0 %v1194
        %1196 = vmatprep.subr.mxu0 0.0
        %v1197 = vand.u32 %v604, 4294901760
        %1198 = vmatpush1.msra.mxu0 %v1197
        %1199 = vmatprep.subr.mxu0 0.0
        %v1200 = vand.u32 %v605, 4294901760
        %1201 = vmatpush1.msra.mxu0 %v1200
        %1202 = vmatprep.subr.mxu0 0.0
        %v1203 = vand.u32 %v606, 4294901760
        %1204 = vmatpush1.msra.mxu0 %v1203
        %1205 = vmatprep.subr.mxu0 0.0
        %v1206 = vand.u32 %v607, 4294901760
        %1207 = vmatpush1.msra.mxu0 %v1206
        %1208 = vmatprep.subr.mxu0 0.0
        %v1209 = vand.u32 %v608, 4294901760
        %1210 = vmatpush1.msra.mxu0 %v1209
        %1211 = vmatprep.subr.mxu0 0.0
        %1212 = vmatpush1.msra.mxu0 0.0
        %1213 = vmatprep.subr.mxu0 0.0
        %1214 = vmatpush1.msra.mxu0 0.0
        %1215 = vmatprep.subr.mxu0 0.0
        %1216 = vmatpush1.msra.mxu0 0.0
        %1217 = vmatprep.subr.mxu0 0.0
        %1218 = vmatpush1.msra.mxu0 0.0
        %1219 = vmatprep.subr.mxu0 0.0
        %1220 = vmatpush1.msra.mxu0 0.0
        %1221 = vmatprep.subr.mxu0 0.0
        %1222 = vmatpush1.msra.mxu0 0.0
        %1223 = vmatprep.subr.mxu0 0.0
        %1224 = vmatpush1.msra.mxu0 0.0
        %1225 = vmatprep.subr.mxu0 0.0
        %1226 = vmatpush1.msra.mxu0 0.0
        %1227 = vmatprep.subr.mxu0 0.0
        %1228 = vmatpush1.msra.mxu0 0.0
        %1229 = vmatprep.subr.mxu0 0.0
        %1230 = vmatpush1.msra.mxu0 0.0
        %1231 = vmatprep.subr.mxu0 0.0
        %1232 = vmatpush1.msra.mxu0 0.0
        %1233 = vmatprep.subr.mxu0 0.0
        %1234 = vmatpush1.msra.mxu0 0.0
        %1235 = vmatprep.subr.mxu0 0.0
        %1236 = vmatpush1.msra.mxu0 0.0
        %1237 = vmatprep.subr.mxu0 0.0
        %1238 = vmatpush1.msra.mxu0 0.0
        %1239 = vmatprep.subr.mxu0 0.0
        %1240 = vmatpush1.msra.mxu0 0.0
        %1241 = vmatprep.subr.mxu0 0.0
        %1242 = vmatpush1.msra.mxu0 0.0
        %1243 = vmatprep.mubr.f32.mxu0 0.0
        %v1244 = vand.u32 %v592, 4294901760
        %1245 = vmatmul.mubr.f32.gmra.mrb[0].mxu0 %v1244
        %v1246 = vpop.f32.mrb[0].mxu0
        %v1247 = vadd.f32 %v1160, %v1246
        %v1248 = vpop.f32.mrb[0].mxu0
        %1249 = vdwg.mxu0
        %v1250 = vmax.f32 %v1247, 0.0
        %v1251 = vld [vmem:[%s2] sm:$0xff]
        %vm1252 = vcmask 64512
        %v1254 = vsel %vm1252, %v1250, 0
        %1256 = vmatprep.subr.mxu0 0.0
        %v1257 = vand.u32 %v1251, 4294901760
        %1258 = vmatpush1.msra.mxu0 %v1257
        %1259 = vmatprep.subr.mxu0 0.0
        %1260 = vmatpush1.msra.mxu0 0.0
        %1261 = vmatprep.subr.mxu0 0.0
        %1262 = vmatpush1.msra.mxu0 0.0
        %1263 = vmatprep.subr.mxu0 0.0
        %1264 = vmatpush1.msra.mxu0 0.0
        %1265 = vmatprep.subr.mxu0 0.0
        %1266 = vmatpush1.msra.mxu0 0.0
        %1267 = vmatprep.subr.mxu0 0.0
        %1268 = vmatpush1.msra.mxu0 0.0
        %1269 = vmatprep.subr.mxu0 0.0
        %1270 = vmatpush1.msra.mxu0 0.0
        %1271 = vmatprep.subr.mxu0 0.0
        %1272 = vmatpush1.msra.mxu0 0.0
        %1273 = vmatprep.subr.mxu0 0.0
        %1274 = vmatpush1.msra.mxu0 0.0
        %1275 = vmatprep.subr.mxu0 0.0
        %1276 = vmatpush1.msra.mxu0 0.0
        %1277 = vmatprep.subr.mxu0 0.0
        %1278 = vmatpush1.msra.mxu0 0.0
        %1279 = vmatprep.subr.mxu0 0.0
        %1280 = vmatpush1.msra.mxu0 0.0
        %1281 = vmatprep.subr.mxu0 0.0
        %1282 = vmatpush1.msra.mxu0 0.0
        %1283 = vmatprep.subr.mxu0 0.0
        %1284 = vmatpush1.msra.mxu0 0.0
        %1285 = vmatprep.subr.mxu0 0.0
        %1286 = vmatpush1.msra.mxu0 0.0
        %1287 = vmatprep.subr.mxu0 0.0
        %1288 = vmatpush1.msra.mxu0 0.0
        %1289 = vmatprep.subr.mxu0 0.0
        %1290 = vmatpush1.msra.mxu0 0.0
        %1291 = vmatprep.subr.mxu0 0.0
        %1292 = vmatpush1.msra.mxu0 0.0
        %1293 = vmatprep.subr.mxu0 0.0
        %1294 = vmatpush1.msra.mxu0 0.0
        %1295 = vmatprep.subr.mxu0 0.0
        %1296 = vmatpush1.msra.mxu0 0.0
        %1297 = vmatprep.subr.mxu0 0.0
        %1298 = vmatpush1.msra.mxu0 0.0
        %1299 = vmatprep.subr.mxu0 0.0
        %1300 = vmatpush1.msra.mxu0 0.0
        %1301 = vmatprep.subr.mxu0 0.0
        %1302 = vmatpush1.msra.mxu0 0.0
        %1303 = vmatprep.subr.mxu0 0.0
        %1304 = vmatpush1.msra.mxu0 0.0
        %1305 = vmatprep.subr.mxu0 0.0
        %1306 = vmatpush1.msra.mxu0 0.0
        %1307 = vmatprep.subr.mxu0 0.0
        %1308 = vmatpush1.msra.mxu0 0.0
        %1309 = vmatprep.subr.mxu0 0.0
        %1310 = vmatpush1.msra.mxu0 0.0
        %1311 = vmatprep.subr.mxu0 0.0
        %1312 = vmatpush1.msra.mxu0 0.0
        %1313 = vmatprep.subr.mxu0 0.0
        %1314 = vmatpush1.msra.mxu0 0.0
        %1315 = vmatprep.subr.mxu0 0.0
        %1316 = vmatpush1.msra.mxu0 0.0
        %1317 = vmatprep.subr.mxu0 0.0
        %1318 = vmatpush1.msra.mxu0 0.0
        %1319 = vmatprep.subr.mxu0 0.0
        %1320 = vmatpush1.msra.mxu0 0.0
        %1321 = vmatprep.mubr.f32.mxu0 0.0
        %v1322 = vand.u32 %v1254, 4294901760
        %v1323 = vsub.f32 %v1254, %v1322
        %v1324 = vand.u32 %v1323, 4294901760
        %v1325 = vsub.f32 %v1323, %v1324
        %v1326 = vand.u32 %v1325, 4294901760
        %1327 = vmatmul.mubr.f32.gmra.mrb[0].mxu0 %v1326
        %v1328 = vpop.f32.mrb[0].mxu0
        %v1329 = vadd.f32 0.0, %v1328
        %v1330 = vpop.f32.mrb[0].mxu0
        %1331 = vdwg.mxu0
        %1332 = vmatprep.subr.mxu0 0.0
        %v1333 = vand.u32 %v1251, 4294901760
        %v1334 = vsub.f32 %v1251, %v1333
        %v1335 = vand.u32 %v1334, 4294901760
        %v1336 = vsub.f32 %v1334, %v1335
        %v1337 = vand.u32 %v1336, 4294901760
        %1338 = vmatpush1.msra.mxu0 %v1337
        %1339 = vmatprep.subr.mxu0 0.0
        %1340 = vmatpush1.msra.mxu0 0.0
        %1341 = vmatprep.subr.mxu0 0.0
        %1342 = vmatpush1.msra.mxu0 0.0
        %1343 = vmatprep.subr.mxu0 0.0
        %1344 = vmatpush1.msra.mxu0 0.0
        %1345 = vmatprep.subr.mxu0 0.0
        %1346 = vmatpush1.msra.mxu0 0.0
        %1347 = vmatprep.subr.mxu0 0.0
        %1348 = vmatpush1.msra.mxu0 0.0
        %1349 = vmatprep.subr.mxu0 0.0
        %1350 = vmatpush1.msra.mxu0 0.0
        %1351 = vmatprep.subr.mxu0 0.0
        %1352 = vmatpush1.msra.mxu0 0.0
        %1353 = vmatprep.subr.mxu0 0.0
        %1354 = vmatpush1.msra.mxu0 0.0
        %1355 = vmatprep.subr.mxu0 0.0
        %1356 = vmatpush1.msra.mxu0 0.0
        %1357 = vmatprep.subr.mxu0 0.0
        %1358 = vmatpush1.msra.mxu0 0.0
        %1359 = vmatprep.subr.mxu0 0.0
        %1360 = vmatpush1.msra.mxu0 0.0
        %1361 = vmatprep.subr.mxu0 0.0
        %1362 = vmatpush1.msra.mxu0 0.0
        %1363 = vmatprep.subr.mxu0 0.0
        %1364 = vmatpush1.msra.mxu0 0.0
        %1365 = vmatprep.subr.mxu0 0.0
        %1366 = vmatpush1.msra.mxu0 0.0
        %1367 = vmatprep.subr.mxu0 0.0
        %1368 = vmatpush1.msra.mxu0 0.0
        %1369 = vmatprep.subr.mxu0 0.0
        %1370 = vmatpush1.msra.mxu0 0.0
        %1371 = vmatprep.subr.mxu0 0.0
        %1372 = vmatpush1.msra.mxu0 0.0
        %1373 = vmatprep.subr.mxu0 0.0
        %1374 = vmatpush1.msra.mxu0 0.0
        %1375 = vmatprep.subr.mxu0 0.0
        %1376 = vmatpush1.msra.mxu0 0.0
        %1377 = vmatprep.subr.mxu0 0.0
        %1378 = vmatpush1.msra.mxu0 0.0
        %1379 = vmatprep.subr.mxu0 0.0
        %1380 = vmatpush1.msra.mxu0 0.0
        %1381 = vmatprep.subr.mxu0 0.0
        %1382 = vmatpush1.msra.mxu0 0.0
        %1383 = vmatprep.subr.mxu0 0.0
        %1384 = vmatpush1.msra.mxu0 0.0
        %1385 = vmatprep.subr.mxu0 0.0
        %1386 = vmatpush1.msra.mxu0 0.0
        %1387 = vmatprep.subr.mxu0 0.0
        %1388 = vmatpush1.msra.mxu0 0.0
        %1389 = vmatprep.subr.mxu0 0.0
        %1390 = vmatpush1.msra.mxu0 0.0
        %1391 = vmatprep.subr.mxu0 0.0
        %1392 = vmatpush1.msra.mxu0 0.0
        %1393 = vmatprep.subr.mxu0 0.0
        %1394 = vmatpush1.msra.mxu0 0.0
        %1395 = vmatprep.subr.mxu0 0.0
        %1396 = vmatpush1.msra.mxu0 0.0
        %1397 = vmatprep.subr.mxu0 0.0
        %1398 = vmatpush1.msra.mxu0 0.0
        %1399 = vmatprep.subr.mxu0 0.0
        %1400 = vmatpush1.msra.mxu0 0.0
        %1401 = vmatprep.mubr.f32.mxu0 0.0
        %v1402 = vand.u32 %v1254, 4294901760
        %1403 = vmatmul.mubr.f32.gmra.mrb[0].mxu0 %v1402
        %v1404 = vpop.f32.mrb[0].mxu0
        %v1405 = vadd.f32 %v1329, %v1404
        %v1406 = vpop.f32.mrb[0].mxu0
        %1407 = vdwg.mxu0
        %1408 = vmatprep.subr.mxu0 0.0
        %v1409 = vand.u32 %v1251, 4294901760
        %v1410 = vsub.f32 %v1251, %v1409
        %1411 = vmatpush1.msra.mxu0 %v1410
        %1412 = vmatprep.subr.mxu0 0.0
        %1413 = vmatpush1.msra.mxu0 0.0
        %1414 = vmatprep.subr.mxu0 0.0
        %1415 = vmatpush1.msra.mxu0 0.0
        %1416 = vmatprep.subr.mxu0 0.0
        %1417 = vmatpush1.msra.mxu0 0.0
        %1418 = vmatprep.subr.mxu0 0.0
        %1419 = vmatpush1.msra.mxu0 0.0
        %1420 = vmatprep.subr.mxu0 0.0
        %1421 = vmatpush1.msra.mxu0 0.0
        %1422 = vmatprep.subr.mxu0 0.0
        %1423 = vmatpush1.msra.mxu0 0.0
        %1424 = vmatprep.subr.mxu0 0.0
        %1425 = vmatpush1.msra.mxu0 0.0
        %1426 = vmatprep.subr.mxu0 0.0
        %1427 = vmatpush1.msra.mxu0 0.0
        %1428 = vmatprep.subr.mxu0 0.0
        %1429 = vmatpush1.msra.mxu0 0.0
        %1430 = vmatprep.subr.mxu0 0.0
        %1431 = vmatpush1.msra.mxu0 0.0
        %1432 = vmatprep.subr.mxu0 0.0
        %1433 = vmatpush1.msra.mxu0 0.0
        %1434 = vmatprep.subr.mxu0 0.0
        %1435 = vmatpush1.msra.mxu0 0.0
        %1436 = vmatprep.subr.mxu0 0.0
        %1437 = vmatpush1.msra.mxu0 0.0
        %1438 = vmatprep.subr.mxu0 0.0
        %1439 = vmatpush1.msra.mxu0 0.0
        %1440 = vmatprep.subr.mxu0 0.0
        %1441 = vmatpush1.msra.mxu0 0.0
        %1442 = vmatprep.subr.mxu0 0.0
        %1443 = vmatpush1.msra.mxu0 0.0
        %1444 = vmatprep.subr.mxu0 0.0
        %1445 = vmatpush1.msra.mxu0 0.0
        %1446 = vmatprep.subr.mxu0 0.0
        %1447 = vmatpush1.msra.mxu0 0.0
        %1448 = vmatprep.subr.mxu0 0.0
        %1449 = vmatpush1.msra.mxu0 0.0
        %1450 = vmatprep.subr.mxu0 0.0
        %1451 = vmatpush1.msra.mxu0 0.0
        %1452 = vmatprep.subr.mxu0 0.0
        %1453 = vmatpush1.msra.mxu0 0.0
        %1454 = vmatprep.subr.mxu0 0.0
        %1455 = vmatpush1.msra.mxu0 0.0
        %1456 = vmatprep.subr.mxu0 0.0
        %1457 = vmatpush1.msra.mxu0 0.0
        %1458 = vmatprep.subr.mxu0 0.0
        %1459 = vmatpush1.msra.mxu0 0.0
        %1460 = vmatprep.subr.mxu0 0.0
        %1461 = vmatpush1.msra.mxu0 0.0
        %1462 = vmatprep.subr.mxu0 0.0
        %1463 = vmatpush1.msra.mxu0 0.0
        %1464 = vmatprep.subr.mxu0 0.0
        %1465 = vmatpush1.msra.mxu0 0.0
        %1466 = vmatprep.subr.mxu0 0.0
        %1467 = vmatpush1.msra.mxu0 0.0
        %1468 = vmatprep.subr.mxu0 0.0
        %1469 = vmatpush1.msra.mxu0 0.0
        %1470 = vmatprep.subr.mxu0 0.0
        %1471 = vmatpush1.msra.mxu0 0.0
        %1472 = vmatprep.subr.mxu0 0.0
        %1473 = vmatpush1.msra.mxu0 0.0
        %1474 = vmatprep.mubr.f32.mxu0 0.0
        %v1475 = vand.u32 %v1254, 4294901760
        %v1476 = vsub.f32 %v1254, %v1475
        %1477 = vmatmul.mubr.f32.gmra.mrb[0].mxu0 %v1476
        %v1478 = vpop.f32.mrb[0].mxu0
        %v1479 = vadd.f32 %v1405, %v1478
        %v1480 = vpop.f32.mrb[0].mxu0
        %1481 = vdwg.mxu0
        %1482 = vmatprep.subr.mxu0 0.0
        %v1483 = vand.u32 %v1251, 4294901760
        %1484 = vmatpush1.msra.mxu0 %v1483
        %1485 = vmatprep.subr.mxu0 0.0
        %1486 = vmatpush1.msra.mxu0 0.0
        %1487 = vmatprep.subr.mxu0 0.0
        %1488 = vmatpush1.msra.mxu0 0.0
        %1489 = vmatprep.subr.mxu0 0.0
        %1490 = vmatpush1.msra.mxu0 0.0
        %1491 = vmatprep.subr.mxu0 0.0
        %1492 = vmatpush1.msra.mxu0 0.0
        %1493 = vmatprep.subr.mxu0 0.0
        %1494 = vmatpush1.msra.mxu0 0.0
        %1495 = vmatprep.subr.mxu0 0.0
        %1496 = vmatpush1.msra.mxu0 0.0
        %1497 = vmatprep.subr.mxu0 0.0
        %1498 = vmatpush1.msra.mxu0 0.0
        %1499 = vmatprep.subr.mxu0 0.0
        %1500 = vmatpush1.msra.mxu0 0.0
        %1501 = vmatprep.subr.mxu0 0.0
        %1502 = vmatpush1.msra.mxu0 0.0
        %1503 = vmatprep.subr.mxu0 0.0
        %1504 = vmatpush1.msra.mxu0 0.0
        %1505 = vmatprep.subr.mxu0 0.0
        %1506 = vmatpush1.msra.mxu0 0.0
        %1507 = vmatprep.subr.mxu0 0.0
        %1508 = vmatpush1.msra.mxu0 0.0
        %1509 = vmatprep.subr.mxu0 0.0
        %1510 = vmatpush1.msra.mxu0 0.0
        %1511 = vmatprep.subr.mxu0 0.0
        %1512 = vmatpush1.msra.mxu0 0.0
        %1513 = vmatprep.subr.mxu0 0.0
        %1514 = vmatpush1.msra.mxu0 0.0
        %1515 = vmatprep.subr.mxu0 0.0
        %1516 = vmatpush1.msra.mxu0 0.0
        %1517 = vmatprep.subr.mxu0 0.0
        %1518 = vmatpush1.msra.mxu0 0.0
        %1519 = vmatprep.subr.mxu0 0.0
        %1520 = vmatpush1.msra.mxu0 0.0
        %1521 = vmatprep.subr.mxu0 0.0
        %1522 = vmatpush1.msra.mxu0 0.0
        %1523 = vmatprep.subr.mxu0 0.0
        %1524 = vmatpush1.msra.mxu0 0.0
        %1525 = vmatprep.subr.mxu0 0.0
        %1526 = vmatpush1.msra.mxu0 0.0
        %1527 = vmatprep.subr.mxu0 0.0
        %1528 = vmatpush1.msra.mxu0 0.0
        %1529 = vmatprep.subr.mxu0 0.0
        %1530 = vmatpush1.msra.mxu0 0.0
        %1531 = vmatprep.subr.mxu0 0.0
        %1532 = vmatpush1.msra.mxu0 0.0
        %1533 = vmatprep.subr.mxu0 0.0
        %1534 = vmatpush1.msra.mxu0 0.0
        %1535 = vmatprep.subr.mxu0 0.0
        %1536 = vmatpush1.msra.mxu0 0.0
        %1537 = vmatprep.subr.mxu0 0.0
        %1538 = vmatpush1.msra.mxu0 0.0
        %1539 = vmatprep.subr.mxu0 0.0
        %1540 = vmatpush1.msra.mxu0 0.0
        %1541 = vmatprep.subr.mxu0 0.0
        %1542 = vmatpush1.msra.mxu0 0.0
        %1543 = vmatprep.subr.mxu0 0.0
        %1544 = vmatpush1.msra.mxu0 0.0
        %1545 = vmatprep.subr.mxu0 0.0
        %1546 = vmatpush1.msra.mxu0 0.0
        %1547 = vmatprep.mubr.f32.mxu0 0.0
        %v1548 = vand.u32 %v1254, 4294901760
        %v1549 = vsub.f32 %v1254, %v1548
        %v1550 = vand.u32 %v1549, 4294901760
        %1551 = vmatmul.mubr.f32.gmra.mrb[0].mxu0 %v1550
        %v1552 = vpop.f32.mrb[0].mxu0
        %v1553 = vadd.f32 %v1479, %v1552
        %v1554 = vpop.f32.mrb[0].mxu0
        %1555 = vdwg.mxu0
        %1556 = vmatprep.subr.mxu0 0.0
        %v1557 = vand.u32 %v1251, 4294901760
        %v1558 = vsub.f32 %v1251, %v1557
        %v1559 = vand.u32 %v1558, 4294901760
        %1560 = vmatpush1.msra.mxu0 %v1559
        %1561 = vmatprep.subr.mxu0 0.0
        %1562 = vmatpush1.msra.mxu0 0.0
        %1563 = vmatprep.subr.mxu0 0.0
        %1564 = vmatpush1.msra.mxu0 0.0
        %1565 = vmatprep.subr.mxu0 0.0
        %1566 = vmatpush1.msra.mxu0 0.0
        %1567 = vmatprep.subr.mxu0 0.0
        %1568 = vmatpush1.msra.mxu0 0.0
        %1569 = vmatprep.subr.mxu0 0.0
        %1570 = vmatpush1.msra.mxu0 0.0
        %1571 = vmatprep.subr.mxu0 0.0
        %1572 = vmatpush1.msra.mxu0 0.0
        %1573 = vmatprep.subr.mxu0 0.0
        %1574 = vmatpush1.msra.mxu0 0.0
        %1575 = vmatprep.subr.mxu0 0.0
        %1576 = vmatpush1.msra.mxu0 0.0
        %1577 = vmatprep.subr.mxu0 0.0
        %1578 = vmatpush1.msra.mxu0 0.0
        %1579 = vmatprep.subr.mxu0 0.0
        %1580 = vmatpush1.msra.mxu0 0.0
        %1581 = vmatprep.subr.mxu0 0.0
        %1582 = vmatpush1.msra.mxu0 0.0
        %1583 = vmatprep.subr.mxu0 0.0
        %1584 = vmatpush1.msra.mxu0 0.0
        %1585 = vmatprep.subr.mxu0 0.0
        %1586 = vmatpush1.msra.mxu0 0.0
        %1587 = vmatprep.subr.mxu0 0.0
        %1588 = vmatpush1.msra.mxu0 0.0
        %1589 = vmatprep.subr.mxu0 0.0
        %1590 = vmatpush1.msra.mxu0 0.0
        %1591 = vmatprep.subr.mxu0 0.0
        %1592 = vmatpush1.msra.mxu0 0.0
        %1593 = vmatprep.subr.mxu0 0.0
        %1594 = vmatpush1.msra.mxu0 0.0
        %1595 = vmatprep.subr.mxu0 0.0
        %1596 = vmatpush1.msra.mxu0 0.0
        %1597 = vmatprep.subr.mxu0 0.0
        %1598 = vmatpush1.msra.mxu0 0.0
        %1599 = vmatprep.subr.mxu0 0.0
        %1600 = vmatpush1.msra.mxu0 0.0
        %1601 = vmatprep.subr.mxu0 0.0
        %1602 = vmatpush1.msra.mxu0 0.0
        %1603 = vmatprep.subr.mxu0 0.0
        %1604 = vmatpush1.msra.mxu0 0.0
        %1605 = vmatprep.subr.mxu0 0.0
        %1606 = vmatpush1.msra.mxu0 0.0
        %1607 = vmatprep.subr.mxu0 0.0
        %1608 = vmatpush1.msra.mxu0 0.0
        %1609 = vmatprep.subr.mxu0 0.0
        %1610 = vmatpush1.msra.mxu0 0.0
        %1611 = vmatprep.subr.mxu0 0.0
        %1612 = vmatpush1.msra.mxu0 0.0
        %1613 = vmatprep.subr.mxu0 0.0
        %1614 = vmatpush1.msra.mxu0 0.0
        %1615 = vmatprep.subr.mxu0 0.0
        %1616 = vmatpush1.msra.mxu0 0.0
        %1617 = vmatprep.subr.mxu0 0.0
        %1618 = vmatpush1.msra.mxu0 0.0
        %1619 = vmatprep.subr.mxu0 0.0
        %1620 = vmatpush1.msra.mxu0 0.0
        %1621 = vmatprep.subr.mxu0 0.0
        %1622 = vmatpush1.msra.mxu0 0.0
        %1623 = vmatprep.mubr.f32.mxu0 0.0
        %v1624 = vand.u32 %v1254, 4294901760
        %1625 = vmatmul.mubr.f32.gmra.mrb[0].mxu0 %v1624
        %v1626 = vpop.f32.mrb[0].mxu0
        %v1627 = vadd.f32 %v1553, %v1626
        %v1628 = vpop.f32.mrb[0].mxu0
        %1629 = vdwg.mxu0
        %1630 = vmatprep.subr.mxu0 0.0
        %v1631 = vand.u32 %v1251, 4294901760
        %1632 = vmatpush1.msra.mxu0 %v1631
        %1633 = vmatprep.subr.mxu0 0.0
        %1634 = vmatpush1.msra.mxu0 0.0
        %1635 = vmatprep.subr.mxu0 0.0
        %1636 = vmatpush1.msra.mxu0 0.0
        %1637 = vmatprep.subr.mxu0 0.0
        %1638 = vmatpush1.msra.mxu0 0.0
        %1639 = vmatprep.subr.mxu0 0.0
        %1640 = vmatpush1.msra.mxu0 0.0
        %1641 = vmatprep.subr.mxu0 0.0
        %1642 = vmatpush1.msra.mxu0 0.0
        %1643 = vmatprep.subr.mxu0 0.0
        %1644 = vmatpush1.msra.mxu0 0.0
        %1645 = vmatprep.subr.mxu0 0.0
        %1646 = vmatpush1.msra.mxu0 0.0
        %1647 = vmatprep.subr.mxu0 0.0
        %1648 = vmatpush1.msra.mxu0 0.0
        %1649 = vmatprep.subr.mxu0 0.0
        %1650 = vmatpush1.msra.mxu0 0.0
        %1651 = vmatprep.subr.mxu0 0.0
        %1652 = vmatpush1.msra.mxu0 0.0
        %1653 = vmatprep.subr.mxu0 0.0
        %1654 = vmatpush1.msra.mxu0 0.0
        %1655 = vmatprep.subr.mxu0 0.0
        %1656 = vmatpush1.msra.mxu0 0.0
        %1657 = vmatprep.subr.mxu0 0.0
        %1658 = vmatpush1.msra.mxu0 0.0
        %1659 = vmatprep.subr.mxu0 0.0
        %1660 = vmatpush1.msra.mxu0 0.0
        %1661 = vmatprep.subr.mxu0 0.0
        %1662 = vmatpush1.msra.mxu0 0.0
        %1663 = vmatprep.subr.mxu0 0.0
        %1664 = vmatpush1.msra.mxu0 0.0
        %1665 = vmatprep.subr.mxu0 0.0
        %1666 = vmatpush1.msra.mxu0 0.0
        %1667 = vmatprep.subr.mxu0 0.0
        %1668 = vmatpush1.msra.mxu0 0.0
        %1669 = vmatprep.subr.mxu0 0.0
        %1670 = vmatpush1.msra.mxu0 0.0
        %1671 = vmatprep.subr.mxu0 0.0
        %1672 = vmatpush1.msra.mxu0 0.0
        %1673 = vmatprep.subr.mxu0 0.0
        %1674 = vmatpush1.msra.mxu0 0.0
        %1675 = vmatprep.subr.mxu0 0.0
        %1676 = vmatpush1.msra.mxu0 0.0
        %1677 = vmatprep.subr.mxu0 0.0
        %1678 = vmatpush1.msra.mxu0 0.0
        %1679 = vmatprep.subr.mxu0 0.0
        %1680 = vmatpush1.msra.mxu0 0.0
        %1681 = vmatprep.subr.mxu0 0.0
        %1682 = vmatpush1.msra.mxu0 0.0
        %1683 = vmatprep.subr.mxu0 0.0
        %1684 = vmatpush1.msra.mxu0 0.0
        %1685 = vmatprep.subr.mxu0 0.0
        %1686 = vmatpush1.msra.mxu0 0.0
        %1687 = vmatprep.subr.mxu0 0.0
        %1688 = vmatpush1.msra.mxu0 0.0
        %1689 = vmatprep.subr.mxu0 0.0
        %1690 = vmatpush1.msra.mxu0 0.0
        %1691 = vmatprep.subr.mxu0 0.0
        %1692 = vmatpush1.msra.mxu0 0.0
        %1693 = vmatprep.subr.mxu0 0.0
        %1694 = vmatpush1.msra.mxu0 0.0
        %1695 = vmatprep.mubr.f32.mxu0 0.0
        %v1696 = vand.u32 %v1254, 4294901760
        %1697 = vmatmul.mubr.f32.gmra.mrb[0].mxu0 %v1696
        %v1698 = vpop.f32.mrb[0].mxu0
        %v1699 = vadd.f32 %v1627, %v1698
        %v1700 = vpop.f32.mrb[0].mxu0
        %1701 = vdwg.mxu0
        %v1702 = vxor.u32 %v1699, 2147483648
        %v1703 = vmul.f32 %v1702, 1.442695
        %v1704 = vpow.pop %v1703
        %v1705 = vadd.f32 %v1704, 1.0
        %v1706 = vrcp.pop %v1705
        %v1707 = vmul.f32 1.0, %v1706
        %v1708 = vlaneseq
        %v1709 = vshrl.u32 %v1708, 7
        %v1710 = vsub.s32 0, %v1709
        %v1711 = vrot.slane %v1707, %v1710
        %1713 = vbcast.lane.b32.xlu0 %v1711, 256
        %v1714 = vpop.permute.xlu0 %1713
        %s1716 = sor.u32 256, 8
        %1717 = vbcast.lane.b32.xlu0 %v1711, %s1716
        %v1718 = vpop.permute.xlu0 %1717
        %s1720 = sor.u32 256, 16
        %1721 = vbcast.lane.b32.xlu0 %v1711, %s1720
        %v1722 = vpop.permute.xlu0 %1721
        %s1724 = sor.u32 256, 24
        %1725 = vbcast.lane.b32.xlu0 %v1711, %s1724
        %v1726 = vpop.permute.xlu0 %1725
        %s1728 = sor.u32 256, 32
        %1729 = vbcast.lane.b32.xlu0 %v1711, %s1728
        %v1730 = vpop.permute.xlu0 %1729
        %s1732 = sor.u32 256, 40
        %1733 = vbcast.lane.b32.xlu0 %v1711, %s1732
        %v1734 = vpop.permute.xlu0 %1733
        %s1736 = sor.u32 256, 48
        %1737 = vbcast.lane.b32.xlu0 %v1711, %s1736
        %v1738 = vpop.permute.xlu0 %1737
        %s1740 = sor.u32 256, 56
        %1741 = vbcast.lane.b32.xlu0 %v1711, %s1740
        %v1742 = vpop.permute.xlu0 %1741
        %s1744 = sor.u32 256, 64
        %1745 = vbcast.lane.b32.xlu0 %v1711, %s1744
        %v1746 = vpop.permute.xlu0 %1745
        %s1748 = sor.u32 256, 72
        %1749 = vbcast.lane.b32.xlu0 %v1711, %s1748
        %v1750 = vpop.permute.xlu0 %1749
        %s1752 = sor.u32 256, 80
        %1753 = vbcast.lane.b32.xlu0 %v1711, %s1752
        %v1754 = vpop.permute.xlu0 %1753
        %s1756 = sor.u32 256, 88
        %1757 = vbcast.lane.b32.xlu0 %v1711, %s1756
        %v1758 = vpop.permute.xlu0 %1757
        %s1760 = sor.u32 256, 96
        %1761 = vbcast.lane.b32.xlu0 %v1711, %s1760
        %v1762 = vpop.permute.xlu0 %1761
        %s1764 = sor.u32 256, 104
        %1765 = vbcast.lane.b32.xlu0 %v1711, %s1764
        %v1766 = vpop.permute.xlu0 %1765
        %s1768 = sor.u32 256, 112
        %1769 = vbcast.lane.b32.xlu0 %v1711, %s1768
        %v1770 = vpop.permute.xlu0 %1769
        %s1772 = sor.u32 256, 120
        %1773 = vbcast.lane.b32.xlu0 %v1711, %s1772
        %v1774 = vpop.permute.xlu0 %1773
        %v1775 = vlaneseq
        %v1776 = vshrl.u32 %v1775, 7
        %v1777 = vsub.s32 1, %v1776
        %v1778 = vrot.slane %v1707, %v1777
        %1780 = vbcast.lane.b32.xlu0 %v1778, 256
        %v1781 = vpop.permute.xlu0 %1780
        %s1783 = sor.u32 256, 8
        %1784 = vbcast.lane.b32.xlu0 %v1778, %s1783
        %v1785 = vpop.permute.xlu0 %1784
        %s1787 = sor.u32 256, 16
        %1788 = vbcast.lane.b32.xlu0 %v1778, %s1787
        %v1789 = vpop.permute.xlu0 %1788
        %s1791 = sor.u32 256, 24
        %1792 = vbcast.lane.b32.xlu0 %v1778, %s1791
        %v1793 = vpop.permute.xlu0 %1792
        %s1795 = sor.u32 256, 32
        %1796 = vbcast.lane.b32.xlu0 %v1778, %s1795
        %v1797 = vpop.permute.xlu0 %1796
        %s1799 = sor.u32 256, 40
        %1800 = vbcast.lane.b32.xlu0 %v1778, %s1799
        %v1801 = vpop.permute.xlu0 %1800
        %s1803 = sor.u32 256, 48
        %1804 = vbcast.lane.b32.xlu0 %v1778, %s1803
        %v1805 = vpop.permute.xlu0 %1804
        %s1807 = sor.u32 256, 56
        %1808 = vbcast.lane.b32.xlu0 %v1778, %s1807
        %v1809 = vpop.permute.xlu0 %1808
        %s1811 = sor.u32 256, 64
        %1812 = vbcast.lane.b32.xlu0 %v1778, %s1811
        %v1813 = vpop.permute.xlu0 %1812
        %s1815 = sor.u32 256, 72
        %1816 = vbcast.lane.b32.xlu0 %v1778, %s1815
        %v1817 = vpop.permute.xlu0 %1816
        %s1819 = sor.u32 256, 80
        %1820 = vbcast.lane.b32.xlu0 %v1778, %s1819
        %v1821 = vpop.permute.xlu0 %1820
        %s1823 = sor.u32 256, 88
        %1824 = vbcast.lane.b32.xlu0 %v1778, %s1823
        %v1825 = vpop.permute.xlu0 %1824
        %s1827 = sor.u32 256, 96
        %1828 = vbcast.lane.b32.xlu0 %v1778, %s1827
        %v1829 = vpop.permute.xlu0 %1828
        %s1831 = sor.u32 256, 104
        %1832 = vbcast.lane.b32.xlu0 %v1778, %s1831
        %v1833 = vpop.permute.xlu0 %1832
        %s1835 = sor.u32 256, 112
        %1836 = vbcast.lane.b32.xlu0 %v1778, %s1835
        %v1837 = vpop.permute.xlu0 %1836
        %s1839 = sor.u32 256, 120
        %1840 = vbcast.lane.b32.xlu0 %v1778, %s1839
        %v1841 = vpop.permute.xlu0 %1840
        %vm1842 = vcmask 7168
        %1843 = vst.msk [vmem:[#allocation3] sm:$0xff] %vm1842, %v1714
        %1844 = vst.msk [vmem:[#allocation3 + $0x8] sm:$0xff] %vm1842, %v1718
        %1845 = vst.msk [vmem:[#allocation3 + $0x10] sm:$0xff] %vm1842, %v1722
        %1846 = vst.msk [vmem:[#allocation3 + $0x18] sm:$0xff] %vm1842, %v1726
        %1847 = vst.msk [vmem:[#allocation3 + $0x20] sm:$0xff] %vm1842, %v1730
        %1848 = vst.msk [vmem:[#allocation3 + $0x28] sm:$0xff] %vm1842, %v1734
        %1849 = vst.msk [vmem:[#allocation3 + $0x30] sm:$0xff] %vm1842, %v1738
        %1850 = vst.msk [vmem:[#allocation3 + $0x38] sm:$0xff] %vm1842, %v1742
        %1851 = vst.msk [vmem:[#allocation3 + $0x40] sm:$0xff] %vm1842, %v1746
        %1852 = vst.msk [vmem:[#allocation3 + $0x48] sm:$0xff] %vm1842, %v1750
        %1853 = vst.msk [vmem:[#allocation3 + $0x50] sm:$0xff] %vm1842, %v1754
        %1854 = vst.msk [vmem:[#allocation3 + $0x58] sm:$0xff] %vm1842, %v1758
        %1855 = vst.msk [vmem:[#allocation3 + $0x60] sm:$0xff] %vm1842, %v1762
        %1856 = vst.msk [vmem:[#allocation3 + $0x68] sm:$0xff] %vm1842, %v1766
        %1857 = vst.msk [vmem:[#allocation3 + $0x70] sm:$0xff] %vm1842, %v1770
        %1858 = vst.msk [vmem:[#allocation3 + $0x78] sm:$0xff] %vm1842, %v1774
        %1859 = vst.msk [vmem:[#allocation3 + $0x80] sm:$0xff] %vm1842, %v1781
        %1860 = vst.msk [vmem:[#allocation3 + $0x88] sm:$0xff] %vm1842, %v1785
        %1861 = vst.msk [vmem:[#allocation3 + $0x90] sm:$0xff] %vm1842, %v1789
        %1862 = vst.msk [vmem:[#allocation3 + $0x98] sm:$0xff] %vm1842, %v1793
        %1863 = vst.msk [vmem:[#allocation3 + $0xa0] sm:$0xff] %vm1842, %v1797
        %1864 = vst.msk [vmem:[#allocation3 + $0xa8] sm:$0xff] %vm1842, %v1801
        %1865 = vst.msk [vmem:[#allocation3 + $0xb0] sm:$0xff] %vm1842, %v1805
        %1866 = vst.msk [vmem:[#allocation3 + $0xb8] sm:$0xff] %vm1842, %v1809
        %1867 = vst.msk [vmem:[#allocation3 + $0xc0] sm:$0xff] %vm1842, %v1813
        %1868 = vst.msk [vmem:[#allocation3 + $0xc8] sm:$0xff] %vm1842, %v1817
        %1869 = vst.msk [vmem:[#allocation3 + $0xd0] sm:$0xff] %vm1842, %v1821
        %1870 = vst.msk [vmem:[#allocation3 + $0xd8] sm:$0xff] %vm1842, %v1825
        %1871 = vst.msk [vmem:[#allocation3 + $0xe0] sm:$0xff] %vm1842, %v1829
        %1872 = vst.msk [vmem:[#allocation3 + $0xe8] sm:$0xff] %vm1842, %v1833
        %1873 = vst.msk [vmem:[#allocation3 + $0xf0] sm:$0xff] %vm1842, %v1837
        %1874 = vst.msk [vmem:[#allocation3 + $0xf8] sm:$0xff] %vm1842, %v1841
      $region44: #{se_attention_forward.1} parent=31 // pred_fallthru
        _
      %p1875 = scmp.eq.s32.totalorder %s18, 1
      // Predicated region
      $region45: #{se_attention_forward.1} parent=31 // pred_check
        %p1876 = pneg %p1875
      $region46: #{se_attention_forward.1} parent=31 // pred_check_branch
        %1878 = sbr.rel (%p1876) target = $region48
      $region47: #{se_attention_forward.1} parent=31 // pred_region
        %v1879 = vld [vmem:[#allocation3] sm:$0xff]
        %v1880 = vld [vmem:[#allocation3 + $0x8] sm:$0xff]
        %v1881 = vld [vmem:[#allocation3 + $0x10] sm:$0xff]
        %v1882 = vld [vmem:[#allocation3 + $0x18] sm:$0xff]
        %v1883 = vld [vmem:[#allocation3 + $0x20] sm:$0xff]
        %v1884 = vld [vmem:[#allocation3 + $0x28] sm:$0xff]
        %v1885 = vld [vmem:[#allocation3 + $0x30] sm:$0xff]
        %v1886 = vld [vmem:[#allocation3 + $0x38] sm:$0xff]
        %v1887 = vld [vmem:[#allocation3 + $0x40] sm:$0xff]
        %v1888 = vld [vmem:[#allocation3 + $0x48] sm:$0xff]
        %v1889 = vld [vmem:[#allocation3 + $0x50] sm:$0xff]
        %v1890 = vld [vmem:[#allocation3 + $0x58] sm:$0xff]
        %v1891 = vld [vmem:[#allocation3 + $0x60] sm:$0xff]
        %v1892 = vld [vmem:[#allocation3 + $0x68] sm:$0xff]
        %v1893 = vld [vmem:[#allocation3 + $0x70] sm:$0xff]
        %v1894 = vld [vmem:[#allocation3 + $0x78] sm:$0xff]
        %v1895 = vld [vmem:[#allocation3 + $0x80] sm:$0xff]
        %v1896 = vld [vmem:[#allocation3 + $0x88] sm:$0xff]
        %v1897 = vld [vmem:[#allocation3 + $0x90] sm:$0xff]
        %v1898 = vld [vmem:[#allocation3 + $0x98] sm:$0xff]
        %v1899 = vld [vmem:[#allocation3 + $0xa0] sm:$0xff]
        %v1900 = vld [vmem:[#allocation3 + $0xa8] sm:$0xff]
        %v1901 = vld [vmem:[#allocation3 + $0xb0] sm:$0xff]
        %v1902 = vld [vmem:[#allocation3 + $0xb8] sm:$0xff]
        %v1903 = vld [vmem:[#allocation3 + $0xc0] sm:$0xff]
        %v1904 = vld [vmem:[#allocation3 + $0xc8] sm:$0xff]
        %v1905 = vld [vmem:[#allocation3 + $0xd0] sm:$0xff]
        %v1906 = vld [vmem:[#allocation3 + $0xd8] sm:$0xff]
        %v1907 = vld [vmem:[#allocation3 + $0xe0] sm:$0xff]
        %v1908 = vld [vmem:[#allocation3 + $0xe8] sm:$0xff]
        %v1909 = vld [vmem:[#allocation3 + $0xf0] sm:$0xff]
        %v1910 = vld [vmem:[#allocation3 + $0xf8] sm:$0xff]
        %v1911 = vld [vmem:[%s181] sm:$0xff]
        %v1912 = vld [vmem:[%s181 + $0x8] sm:$0xff]
        %v1913 = vld [vmem:[%s181 + $0x10] sm:$0xff]
        %v1914 = vld [vmem:[%s181 + $0x18] sm:$0xff]
        %v1915 = vld [vmem:[%s181 + $0x20] sm:$0xff]
        %v1916 = vld [vmem:[%s181 + $0x28] sm:$0xff]
        %v1917 = vld [vmem:[%s181 + $0x30] sm:$0xff]
        %v1918 = vld [vmem:[%s181 + $0x38] sm:$0xff]
        %v1919 = vld [vmem:[%s181 + $0x40] sm:$0xff]
        %v1920 = vld [vmem:[%s181 + $0x48] sm:$0xff]
        %v1921 = vld [vmem:[%s181 + $0x50] sm:$0xff]
        %v1922 = vld [vmem:[%s181 + $0x58] sm:$0xff]
        %v1923 = vld [vmem:[%s181 + $0x60] sm:$0xff]
        %v1924 = vld [vmem:[%s181 + $0x68] sm:$0xff]
        %v1925 = vld [vmem:[%s181 + $0x70] sm:$0xff]
        %v1926 = vld [vmem:[%s181 + $0x78] sm:$0xff]
        %v1927 = vld [vmem:[%s181 + $0x80] sm:$0xff]
        %v1928 = vld [vmem:[%s181 + $0x88] sm:$0xff]
        %v1929 = vld [vmem:[%s181 + $0x90] sm:$0xff]
        %v1930 = vld [vmem:[%s181 + $0x98] sm:$0xff]
        %v1931 = vld [vmem:[%s181 + $0xa0] sm:$0xff]
        %v1932 = vld [vmem:[%s181 + $0xa8] sm:$0xff]
        %v1933 = vld [vmem:[%s181 + $0xb0] sm:$0xff]
        %v1934 = vld [vmem:[%s181 + $0xb8] sm:$0xff]
        %v1935 = vld [vmem:[%s181 + $0xc0] sm:$0xff]
        %v1936 = vld [vmem:[%s181 + $0xc8] sm:$0xff]
        %v1937 = vld [vmem:[%s181 + $0xd0] sm:$0xff]
        %v1938 = vld [vmem:[%s181 + $0xd8] sm:$0xff]
        %v1939 = vld [vmem:[%s181 + $0xe0] sm:$0xff]
        %v1940 = vld [vmem:[%s181 + $0xe8] sm:$0xff]
        %v1941 = vld [vmem:[%s181 + $0xf0] sm:$0xff]
        %v1942 = vld [vmem:[%s181 + $0xf8] sm:$0xff]
        %v1943 = vld [vmem:[%s181 + $0x100] sm:$0xff]
        %v1944 = vld [vmem:[%s181 + $0x108] sm:$0xff]
        %v1945 = vld [vmem:[%s181 + $0x110] sm:$0xff]
        %v1946 = vld [vmem:[%s181 + $0x118] sm:$0xff]
        %v1947 = vld [vmem:[%s181 + $0x120] sm:$0xff]
        %v1948 = vld [vmem:[%s181 + $0x128] sm:$0xff]
        %v1949 = vld [vmem:[%s181 + $0x130] sm:$0xff]
        %v1950 = vld [vmem:[%s181 + $0x138] sm:$0xff]
        %v1951 = vld [vmem:[%s181 + $0x140] sm:$0xff]
        %v1952 = vld [vmem:[%s181 + $0x148] sm:$0xff]
        %v1953 = vld [vmem:[%s181 + $0x150] sm:$0xff]
        %v1954 = vld [vmem:[%s181 + $0x158] sm:$0xff]
        %v1955 = vld [vmem:[%s181 + $0x160] sm:$0xff]
        %v1956 = vld [vmem:[%s181 + $0x168] sm:$0xff]
        %v1957 = vld [vmem:[%s181 + $0x170] sm:$0xff]
        %v1958 = vld [vmem:[%s181 + $0x178] sm:$0xff]
        %v1959 = vld [vmem:[%s181 + $0x180] sm:$0xff]
        %v1960 = vld [vmem:[%s181 + $0x188] sm:$0xff]
        %v1961 = vld [vmem:[%s181 + $0x190] sm:$0xff]
        %v1962 = vld [vmem:[%s181 + $0x198] sm:$0xff]
        %v1963 = vld [vmem:[%s181 + $0x1a0] sm:$0xff]
        %v1964 = vld [vmem:[%s181 + $0x1a8] sm:$0xff]
        %v1965 = vld [vmem:[%s181 + $0x1b0] sm:$0xff]
        %v1966 = vld [vmem:[%s181 + $0x1b8] sm:$0xff]
        %v1967 = vld [vmem:[%s181 + $0x1c0] sm:$0xff]
        %v1968 = vld [vmem:[%s181 + $0x1c8] sm:$0xff]
        %v1969 = vld [vmem:[%s181 + $0x1d0] sm:$0xff]
        %v1970 = vld [vmem:[%s181 + $0x1d8] sm:$0xff]
        %v1971 = vld [vmem:[%s181 + $0x1e0] sm:$0xff]
        %v1972 = vld [vmem:[%s181 + $0x1e8] sm:$0xff]
        %v1973 = vld [vmem:[%s181 + $0x1f0] sm:$0xff]
        %v1974 = vld [vmem:[%s181 + $0x1f8] sm:$0xff]
        %1976 = vset.pattern.permute.xlu0 0
        %1977 = vperm.xlu0 %1976, %v1879
        %v1978 = vpop.permute.xlu0 %1977
        %1981 = vset.pattern.permute.xlu0 0
        %1982 = vperm.xlu0 %1981, %v1880
        %v1983 = vpop.permute.xlu0 %1982
        %1986 = vset.pattern.permute.xlu0 0
        %1987 = vperm.xlu0 %1986, %v1881
        %v1988 = vpop.permute.xlu0 %1987
        %1991 = vset.pattern.permute.xlu0 0
        %1992 = vperm.xlu0 %1991, %v1882
        %v1993 = vpop.permute.xlu0 %1992
        %1996 = vset.pattern.permute.xlu0 0
        %1997 = vperm.xlu0 %1996, %v1883
        %v1998 = vpop.permute.xlu0 %1997
        %2001 = vset.pattern.permute.xlu0 0
        %2002 = vperm.xlu0 %2001, %v1884
        %v2003 = vpop.permute.xlu0 %2002
        %2006 = vset.pattern.permute.xlu0 0
        %2007 = vperm.xlu0 %2006, %v1885
        %v2008 = vpop.permute.xlu0 %2007
        %2011 = vset.pattern.permute.xlu0 0
        %2012 = vperm.xlu0 %2011, %v1886
        %v2013 = vpop.permute.xlu0 %2012
        %2016 = vset.pattern.permute.xlu0 0
        %2017 = vperm.xlu0 %2016, %v1887
        %v2018 = vpop.permute.xlu0 %2017
        %2021 = vset.pattern.permute.xlu0 0
        %2022 = vperm.xlu0 %2021, %v1888
        %v2023 = vpop.permute.xlu0 %2022
        %2026 = vset.pattern.permute.xlu0 0
        %2027 = vperm.xlu0 %2026, %v1889
        %v2028 = vpop.permute.xlu0 %2027
        %2031 = vset.pattern.permute.xlu0 0
        %2032 = vperm.xlu0 %2031, %v1890
        %v2033 = vpop.permute.xlu0 %2032
        %2036 = vset.pattern.permute.xlu0 0
        %2037 = vperm.xlu0 %2036, %v1891
        %v2038 = vpop.permute.xlu0 %2037
        %2041 = vset.pattern.permute.xlu0 0
        %2042 = vperm.xlu0 %2041, %v1892
        %v2043 = vpop.permute.xlu0 %2042
        %2046 = vset.pattern.permute.xlu0 0
        %2047 = vperm.xlu0 %2046, %v1893
        %v2048 = vpop.permute.xlu0 %2047
        %2051 = vset.pattern.permute.xlu0 0
        %2052 = vperm.xlu0 %2051, %v1894
        %v2053 = vpop.permute.xlu0 %2052
        %2056 = vset.pattern.permute.xlu0 0
        %2057 = vperm.xlu0 %2056, %v1895
        %v2058 = vpop.permute.xlu0 %2057
        %2061 = vset.pattern.permute.xlu0 0
        %2062 = vperm.xlu0 %2061, %v1896
        %v2063 = vpop.permute.xlu0 %2062
        %2066 = vset.pattern.permute.xlu0 0
        %2067 = vperm.xlu0 %2066, %v1897
        %v2068 = vpop.permute.xlu0 %2067
        %2071 = vset.pattern.permute.xlu0 0
        %2072 = vperm.xlu0 %2071, %v1898
        %v2073 = vpop.permute.xlu0 %2072
        %2076 = vset.pattern.permute.xlu0 0
        %2077 = vperm.xlu0 %2076, %v1899
        %v2078 = vpop.permute.xlu0 %2077
        %2081 = vset.pattern.permute.xlu0 0
        %2082 = vperm.xlu0 %2081, %v1900
        %v2083 = vpop.permute.xlu0 %2082
        %2086 = vset.pattern.permute.xlu0 0
        %2087 = vperm.xlu0 %2086, %v1901
        %v2088 = vpop.permute.xlu0 %2087
        %2091 = vset.pattern.permute.xlu0 0
        %2092 = vperm.xlu0 %2091, %v1902
        %v2093 = vpop.permute.xlu0 %2092
        %2096 = vset.pattern.permute.xlu0 0
        %2097 = vperm.xlu0 %2096, %v1903
        %v2098 = vpop.permute.xlu0 %2097
        %2101 = vset.pattern.permute.xlu0 0
        %2102 = vperm.xlu0 %2101, %v1904
        %v2103 = vpop.permute.xlu0 %2102
        %2106 = vset.pattern.permute.xlu0 0
        %2107 = vperm.xlu0 %2106, %v1905
        %v2108 = vpop.permute.xlu0 %2107
        %2111 = vset.pattern.permute.xlu0 0
        %2112 = vperm.xlu0 %2111, %v1906
        %v2113 = vpop.permute.xlu0 %2112
        %2116 = vset.pattern.permute.xlu0 0
        %2117 = vperm.xlu0 %2116, %v1907
        %v2118 = vpop.permute.xlu0 %2117
        %2121 = vset.pattern.permute.xlu0 0
        %2122 = vperm.xlu0 %2121, %v1908
        %v2123 = vpop.permute.xlu0 %2122
        %2126 = vset.pattern.permute.xlu0 0
        %2127 = vperm.xlu0 %2126, %v1909
        %v2128 = vpop.permute.xlu0 %2127
        %2131 = vset.pattern.permute.xlu0 0
        %2132 = vperm.xlu0 %2131, %v1910
        %v2133 = vpop.permute.xlu0 %2132
        %v2135 = vmul.f32 %v1911, %v1978
        %v2136 = vmul.f32 %v1912, %v1978
        %v2137 = vmul.f32 %v1913, %v1983
        %v2138 = vmul.f32 %v1914, %v1983
        %v2139 = vmul.f32 %v1915, %v1988
        %v2140 = vmul.f32 %v1916, %v1988
        %v2141 = vmul.f32 %v1917, %v1993
        %v2142 = vmul.f32 %v1918, %v1993
        %v2143 = vmul.f32 %v1919, %v1998
        %v2144 = vmul.f32 %v1920, %v1998
        %v2145 = vmul.f32 %v1921, %v2003
        %v2146 = vmul.f32 %v1922, %v2003
        %v2147 = vmul.f32 %v1923, %v2008
        %v2148 = vmul.f32 %v1924, %v2008
        %v2149 = vmul.f32 %v1925, %v2013
        %v2150 = vmul.f32 %v1926, %v2013
        %v2151 = vmul.f32 %v1927, %v2018
        %v2152 = vmul.f32 %v1928, %v2018
        %v2153 = vmul.f32 %v1929, %v2023
        %v2154 = vmul.f32 %v1930, %v2023
        %v2155 = vmul.f32 %v1931, %v2028
        %v2156 = vmul.f32 %v1932, %v2028
        %v2157 = vmul.f32 %v1933, %v2033
        %v2158 = vmul.f32 %v1934, %v2033
        %v2159 = vmul.f32 %v1935, %v2038
        %v2160 = vmul.f32 %v1936, %v2038
        %v2161 = vmul.f32 %v1937, %v2043
        %v2162 = vmul.f32 %v1938, %v2043
        %v2163 = vmul.f32 %v1939, %v2048
        %v2164 = vmul.f32 %v1940, %v2048
        %v2165 = vmul.f32 %v1941, %v2053
        %v2166 = vmul.f32 %v1942, %v2053
        %v2167 = vmul.f32 %v1943, %v2058
        %v2168 = vmul.f32 %v1944, %v2058
        %v2169 = vmul.f32 %v1945, %v2063
        %v2170 = vmul.f32 %v1946, %v2063
        %v2171 = vmul.f32 %v1947, %v2068
        %v2172 = vmul.f32 %v1948, %v2068
        %v2173 = vmul.f32 %v1949, %v2073
        %v2174 = vmul.f32 %v1950, %v2073
        %v2175 = vmul.f32 %v1951, %v2078
        %v2176 = vmul.f32 %v1952, %v2078
        %v2177 = vmul.f32 %v1953, %v2083
        %v2178 = vmul.f32 %v1954, %v2083
        %v2179 = vmul.f32 %v1955, %v2088
        %v2180 = vmul.f32 %v1956, %v2088
        %v2181 = vmul.f32 %v1957, %v2093
        %v2182 = vmul.f32 %v1958, %v2093
        %v2183 = vmul.f32 %v1959, %v2098
        %v2184 = vmul.f32 %v1960, %v2098
        %v2185 = vmul.f32 %v1961, %v2103
        %v2186 = vmul.f32 %v1962, %v2103
        %v2187 = vmul.f32 %v1963, %v2108
        %v2188 = vmul.f32 %v1964, %v2108
        %v2189 = vmul.f32 %v1965, %v2113
        %v2190 = vmul.f32 %v1966, %v2113
        %v2191 = vmul.f32 %v1967, %v2118
        %v2192 = vmul.f32 %v1968, %v2118
        %v2193 = vmul.f32 %v1969, %v2123
        %v2194 = vmul.f32 %v1970, %v2123
        %v2195 = vmul.f32 %v1971, %v2128
        %v2196 = vmul.f32 %v1972, %v2128
        %v2197 = vmul.f32 %v1973, %v2133
        %v2198 = vmul.f32 %v1974, %v2133
        %2199 = vst [vmem:[%s188] sm:$0xff] %v2135
        %2200 = vst [vmem:[%s188 + $0x8] sm:$0xff] %v2136
        %2201 = vst [vmem:[%s188 + $0x10] sm:$0xff] %v2137
        %2202 = vst [vmem:[%s188 + $0x18] sm:$0xff] %v2138
        %2203 = vst [vmem:[%s188 + $0x20] sm:$0xff] %v2139
        %2204 = vst [vmem:[%s188 + $0x28] sm:$0xff] %v2140
        %2205 = vst [vmem:[%s188 + $0x30] sm:$0xff] %v2141
        %2206 = vst [vmem:[%s188 + $0x38] sm:$0xff] %v2142
        %2207 = vst [vmem:[%s188 + $0x40] sm:$0xff] %v2143
        %2208 = vst [vmem:[%s188 + $0x48] sm:$0xff] %v2144
        %2209 = vst [vmem:[%s188 + $0x50] sm:$0xff] %v2145
        %2210 = vst [vmem:[%s188 + $0x58] sm:$0xff] %v2146
        %2211 = vst [vmem:[%s188 + $0x60] sm:$0xff] %v2147
        %2212 = vst [vmem:[%s188 + $0x68] sm:$0xff] %v2148
        %2213 = vst [vmem:[%s188 + $0x70] sm:$0xff] %v2149
        %2214 = vst [vmem:[%s188 + $0x78] sm:$0xff] %v2150
        %2215 = vst [vmem:[%s188 + $0x80] sm:$0xff] %v2151
        %2216 = vst [vmem:[%s188 + $0x88] sm:$0xff] %v2152
        %2217 = vst [vmem:[%s188 + $0x90] sm:$0xff] %v2153
        %2218 = vst [vmem:[%s188 + $0x98] sm:$0xff] %v2154
        %2219 = vst [vmem:[%s188 + $0xa0] sm:$0xff] %v2155
        %2220 = vst [vmem:[%s188 + $0xa8] sm:$0xff] %v2156
        %2221 = vst [vmem:[%s188 + $0xb0] sm:$0xff] %v2157
        %2222 = vst [vmem:[%s188 + $0xb8] sm:$0xff] %v2158
        %2223 = vst [vmem:[%s188 + $0xc0] sm:$0xff] %v2159
        %2224 = vst [vmem:[%s188 + $0xc8] sm:$0xff] %v2160
        %2225 = vst [vmem:[%s188 + $0xd0] sm:$0xff] %v2161
        %2226 = vst [vmem:[%s188 + $0xd8] sm:$0xff] %v2162
        %2227 = vst [vmem:[%s188 + $0xe0] sm:$0xff] %v2163
        %2228 = vst [vmem:[%s188 + $0xe8] sm:$0xff] %v2164
        %2229 = vst [vmem:[%s188 + $0xf0] sm:$0xff] %v2165
        %2230 = vst [vmem:[%s188 + $0xf8] sm:$0xff] %v2166
        %2231 = vst [vmem:[%s188 + $0x100] sm:$0xff] %v2167
        %2232 = vst [vmem:[%s188 + $0x108] sm:$0xff] %v2168
        %2233 = vst [vmem:[%s188 + $0x110] sm:$0xff] %v2169
        %2234 = vst [vmem:[%s188 + $0x118] sm:$0xff] %v2170
        %2235 = vst [vmem:[%s188 + $0x120] sm:$0xff] %v2171
        %2236 = vst [vmem:[%s188 + $0x128] sm:$0xff] %v2172
        %2237 = vst [vmem:[%s188 + $0x130] sm:$0xff] %v2173
        %2238 = vst [vmem:[%s188 + $0x138] sm:$0xff] %v2174
        %2239 = vst [vmem:[%s188 + $0x140] sm:$0xff] %v2175
        %2240 = vst [vmem:[%s188 + $0x148] sm:$0xff] %v2176
        %2241 = vst [vmem:[%s188 + $0x150] sm:$0xff] %v2177
        %2242 = vst [vmem:[%s188 + $0x158] sm:$0xff] %v2178
        %2243 = vst [vmem:[%s188 + $0x160] sm:$0xff] %v2179
        %2244 = vst [vmem:[%s188 + $0x168] sm:$0xff] %v2180
        %2245 = vst [vmem:[%s188 + $0x170] sm:$0xff] %v2181
        %2246 = vst [vmem:[%s188 + $0x178] sm:$0xff] %v2182
        %2247 = vst [vmem:[%s188 + $0x180] sm:$0xff] %v2183
        %2248 = vst [vmem:[%s188 + $0x188] sm:$0xff] %v2184
        %2249 = vst [vmem:[%s188 + $0x190] sm:$0xff] %v2185
        %2250 = vst [vmem:[%s188 + $0x198] sm:$0xff] %v2186
        %2251 = vst [vmem:[%s188 + $0x1a0] sm:$0xff] %v2187
        %2252 = vst [vmem:[%s188 + $0x1a8] sm:$0xff] %v2188
        %2253 = vst [vmem:[%s188 + $0x1b0] sm:$0xff] %v2189
        %2254 = vst [vmem:[%s188 + $0x1b8] sm:$0xff] %v2190
        %2255 = vst [vmem:[%s188 + $0x1c0] sm:$0xff] %v2191
        %2256 = vst [vmem:[%s188 + $0x1c8] sm:$0xff] %v2192
        %2257 = vst [vmem:[%s188 + $0x1d0] sm:$0xff] %v2193
        %2258 = vst [vmem:[%s188 + $0x1d8] sm:$0xff] %v2194
        %2259 = vst [vmem:[%s188 + $0x1e0] sm:$0xff] %v2195
        %2260 = vst [vmem:[%s188 + $0x1e8] sm:$0xff] %v2196
        %2261 = vst [vmem:[%s188 + $0x1f0] sm:$0xff] %v2197
        %2262 = vst [vmem:[%s188 + $0x1f8] sm:$0xff] %v2198
      $region48: #{se_attention_forward.1} parent=31 // pred_fallthru
        _
      %s2263 = smul.u32 %s19, %s18
      %s2264 = smul.u32 2, %s2263
      %p2265 = scmp.lt.s32.totalorder %s2264, 1
      %s2266 = scalar_select %p2265, %s2264, 1
      %s2267 = smul.addr %s2266, 8
      %s2268 = scalar_lea.vmem %s3, %s2267
      // Predicated region
      $region49: #{se_attention_forward.1} parent=31 // pred_check
        %p2269 = pneg %p114
      $region50: #{se_attention_forward.1} parent=31 // pred_check_branch
        %2271 = sbr.rel (%p2269) target = $region52
      $region51: #{se_attention_forward.1} parent=31 // pred_region
        %s2272 = smul.u32 %s19, %s18
        %s2273 = smul.u32 2, %s2272
      $region52: #{se_attention_forward.1} parent=31 // pred_fallthru
        _
    $region32: #{se_attention_forward.1} parent=5 // pred_fallthru
      _
    %p2274 = scmp.le.s32.totalorder 2, %s9
    // Predicated region
    $region53: #{se_attention_forward.1} parent=5 // pred_check
      %p2275 = pneg %p2274
    $region54: #{se_attention_forward.1} parent=5 // pred_check_branch
      %2277 = sbr.rel (%p2275) target = $region56
    $region55: #{se_attention_forward.1} parent=5 // pred_region
      %s2278 = ssub.s32 %s9, 2
      // Predicated region
      $region57: #{se_attention_forward.1} parent=55 // pred_check
        %p2279 = pneg %p120
      $region58: #{se_attention_forward.1} parent=55 // pred_check_branch
        %2281 = sbr.rel (%p2279) target = $region60
      $region59: #{se_attention_forward.1} parent=55 // pred_region
        %s2282 = smul.u32 %s21, %s20
        %s2283 = smul.u32 2, %s2282
        %p2284 = scmp.lt.s32.totalorder %s2283, 1
        %s2285 = scalar_select %p2284, %s2283, 1
        %s2286 = smul.addr %s2285, 8
        %s2287 = scalar_lea.vmem %s3, %s2286
      $region60: #{se_attention_forward.1} parent=55 // pred_fallthru
        _
    $region56: #{se_attention_forward.1} parent=5 // pred_fallthru
      _
  $region6: #{se_attention_forward.1} parent=0 // loop_footer
    %s13 = sadd.s32 1, %s9
  $region7: #{se_attention_forward.1} parent=0 // loop_footer_branch
    %8 = sbr.rel target = $region3
  $region8: #{se_attention_forward.1} parent=0 // loop_exit
    _

</llo_original>
